<compile_context>
chip_gen: v6e
topology: v6e:2x2x1
jax: 0.10.0
libtpu: 0.0.40
codegen_flags: <defaults>
</compile_context>

<pallas_src>
import jax
import jax.numpy as jnp
from jax.experimental import pallas as pl
from jax.experimental.pallas import tpu as pltpu


_SUBLANE_MULT = {4: 8, 2: 16, 1: 32}  # itemsize -> sublane packing


def _cdiv(a, b):
    return -(-a // b)


def _choose_channel_tile(C, row_bytes, sublane_mult, max_block_bytes, min_blocks=4):
    """Pick a channel tile (multiple of the sublane packing) such that:
         * the activation block stays under max_block_bytes (when possible),
         * the grid has at least `min_blocks` steps (keeps DMA/compute overlap),
         * the grid length is even (v7x: equal work on both TensorCores),
         * among equally good grids, padding waste on the ragged tail is minimal.
       The grid uses cdiv, so the last block may be ragged; Pallas masks it."""
    c_pad = _cdiv(C, sublane_mult) * sublane_mult
    best_key, best_tc = None, sublane_mult
    for tc in range(sublane_mult, c_pad + 1, sublane_mult):
        if tc * row_bytes > max_block_bytes and tc != sublane_mult:
            continue  # over budget (but always keep the minimal tile as fallback)
        g = _cdiv(C, tc)
        # Preference order: grid >= min_blocks, even grid, fewest steps, least padding.
        key = (g >= min_blocks, g % 2 == 0, -g, -tc)
        if best_key is None or key > best_key:
            best_key, best_tc = key, tc
    return best_tc


def channel_scale_mul(x356, x351, *, max_block_bytes=2 << 20, min_blocks=4):
    """Computes x356 * x351 with broadcasting, matching PyTorch semantics.

    x356: (1, C, 1, 1)   per-channel scale
    x351: (1, C, H, W)   activations
    returns: (1, C, H, W)
    """
    assert x356.shape[0] == 1 and x351.shape[0] == 1
    _, C, H, W = x351.shape
    assert x356.shape == (1, C, 1, 1)
    HW = H * W

    out_dtype = jnp.result_type(x356.dtype, x351.dtype)

    x2d = x351.reshape(C, HW)
    s2d = x356.reshape(C, 1)

    # Sublane packing must satisfy every operand's dtype (bf16 packs 16, int8 packs 32).
    sublane_mult = max(
        _SUBLANE_MULT.get(jnp.dtype(x351.dtype).itemsize, 8),
        _SUBLANE_MULT.get(jnp.dtype(x356.dtype).itemsize, 8),
        _SUBLANE_MULT.get(jnp.dtype(out_dtype).itemsize, 8),
    )
    hw_padded = ((HW + 127) // 128) * 128            # lane padding in VMEM
    row_bytes = hw_padded * jnp.dtype(x351.dtype).itemsize

    tc = _choose_channel_tile(C, row_bytes, sublane_mult, max_block_bytes, min_blocks)
    grid = _cdiv(C, tc)                              # last block may be ragged

    def kernel(s_ref, x_ref, o_ref):
        # s_ref: (tc, 1) scale tile, x_ref / o_ref: (tc, HW) activation tiles.
        o_ref[...] = (s_ref[...] * x_ref[...]).astype(o_ref.dtype)

    out2d = pl.pallas_call(
        kernel,
        out_shape=jax.ShapeDtypeStruct((C, HW), out_dtype),
        grid_spec=pltpu.PrefetchScalarGridSpec(
            num_scalar_prefetch=0,
            grid=(grid,),
            in_specs=[
                # Scale: tiny per-step tile; its DMA overlaps the activation DMA.
                pl.BlockSpec((tc, 1), lambda i: (i, 0)),
                # Activations: large channel tiles, full spatial width.
                pl.BlockSpec((tc, HW), lambda i: (i, 0)),
            ],
            out_specs=pl.BlockSpec((tc, HW), lambda i: (i, 0)),
        ),
        compiler_params=pltpu.CompilerParams(
            dimension_semantics=("parallel",),   # even grid -> clean 2-TC split on v7x
            vmem_limit_bytes=32 * 1024 * 1024,   # safe scoped budget on v5e/v6e/v7x
        ),
    )(s2d, x2d)

    return out2d.reshape(1, C, H, W)


if __name__ == "__main__":
    key = jax.random.PRNGKey(0)
    k1, k2 = jax.random.split(key)

    # Exact shapes from the module spec (only ~2.3 MB of activations).
    C, H, W = 2904, 14, 14
    x351 = jax.random.normal(k1, (1, C, H, W), dtype=jnp.float32)
    x356 = jax.random.normal(k2, (1, C, 1, 1), dtype=jnp.float32)

    out = jax.block_until_ready(channel_scale_mul(x356, x351))

    # Reference check (plain JAX broadcasting == PyTorch broadcasting here).
    ref = x356 * x351
    assert out.shape == ref.shape
    assert jnp.allclose(out, ref, atol=1e-6, rtol=1e-6)

    print("KERNEL_OK")
</pallas_src>

<mosaic_0001>
module attributes {stable_mosaic.version = 11 : i64} {
  func.func @kernel(%arg0: i32, %arg1: memref<728x1xf32, #tpu.memory_space<vmem>>, %arg2: memref<728x196xf32, #tpu.memory_space<vmem>>, %arg3: memref<728x196xf32, #tpu.memory_space<vmem>>) attributes {dimension_semantics = [#tpu.dimension_semantics<parallel>], iteration_bounds = array<i64: 4>, scalar_prefetch = 0 : i64, scratch_operands = 0 : i64, tpu.core_type = #tpu.core_type<tc>, window_params = [{transform_indices = @transform_0, window_bounds = array<i64: 728, 1>}, {transform_indices = @transform_1, window_bounds = array<i64: 728, 196>}, {transform_indices = @transform_2, window_bounds = array<i64: 728, 196>}]} {
    %c0 = arith.constant 0 : index
    %c0_0 = arith.constant 0 : index
    %0 = vector.load %arg1[%c0, %c0_0] : memref<728x1xf32, #tpu.memory_space<vmem>>, vector<728x1xf32>
    %c0_1 = arith.constant 0 : index
    %c0_2 = arith.constant 0 : index
    %1 = vector.load %arg2[%c0_1, %c0_2] : memref<728x196xf32, #tpu.memory_space<vmem>>, vector<728x196xf32>
    %2 = vector.broadcast %0 : vector<728x1xf32> to vector<728x196xf32>
    %3 = arith.mulf %2, %1 : vector<728x196xf32>
    %c0_3 = arith.constant 0 : index
    %c0_4 = arith.constant 0 : index
    %4 = vector.load %arg3[%c0_3, %c0_4] : memref<728x196xf32, #tpu.memory_space<vmem>>, vector<728x196xf32>
    tpu.vector_store %arg3[%c0_3, %c0_4], %3 {strides = array<i32>} : memref<728x196xf32, #tpu.memory_space<vmem>>, vector<728x196xf32>,
    return
  }
  func.func @transform_0(%arg0: i32) -> (i32, i32) {
    %c0_i32 = arith.constant 0 : i32
    %c0_i32_0 = arith.constant 0 : i32
    return %arg0, %c0_i32 : i32, i32
  }
  func.func @transform_1(%arg0: i32) -> (i32, i32) {
    %c0_i32 = arith.constant 0 : i32
    %c0_i32_0 = arith.constant 0 : i32
    return %arg0, %c0_i32 : i32, i32
  }
  func.func @transform_2(%arg0: i32) -> (i32, i32) {
    %c0_i32 = arith.constant 0 : i32
    %c0_i32_0 = arith.constant 0 : i32
    return %arg0, %c0_i32 : i32, i32
  }
}

</mosaic_0001>

<llo_original>
// kernel: tpu_custom_call.1
$region0: #{tpu_custom_call.1}
  #allocation0 [shape = 'u32[]', space=smem, size = 0x4, offset = 0x4, fixed_abs, tag = 'smem constant byte address 0x4 - core index']
  #allocation1 [shape = 'u32[144,128]{1,0:T(1,128)}', space=vmem, size = 0x12000, scoped, tag = 'internal scratch']
  %s0 = inlined_call_operand.vmem [shape: f32[2904,1], index: 0, kind: input, shape index: {}]
  %s1 = inlined_call_operand.vmem [shape: f32[2904,196], index: 1, kind: input, shape index: {}]
  %s2 = inlined_call_operand.vmem [shape: f32[2904,196], index: 2, kind: output, shape index: {}]
  %s3 = sld [smem:[#allocation0]]
  $region67: #{tpu_custom_call.1} parent=0
    _
  %s5 = ssub.s32 1, %s3
  %s6 = scalar_select 0, %s5, %s3
  $region1: #{tpu_custom_call.1} parent=0
    #allocation2 [shape = 'u8[1490944]{0}', space=vmem, size = 0x16c000, scoped, tag = 'output window, operand 0']
    loop: start=0, step=1, limit=6
    $region2: #{tpu_custom_call.1} parent=1 // loop_pre_header
      _
    $region3: #{tpu_custom_call.1} parent=1 // loop_header
      %s8 = sphi 0, %s12
      %p9 = scmp.ge.s32.totalorder %s8, 6
      %s18 = sphi 0, %s20
      %s21 = sphi 0, %s18
      %s22 = sphi 0, %s21
      %s38 = sphi 0, %s22
      %s44 = sphi 0, %s46
      %s47 = sphi 0, %s44
      %s48 = sphi 0, %s47
      %s64 = sphi 0, %s48
      %s70 = sphi 0, %s72
      %s73 = sphi 0, %s70
      %s74 = sphi 0, %s73
      %s90 = sphi 0, %s74
    $region4: #{tpu_custom_call.1} parent=1 // loop_header_branch
      %11 = sbr.rel (%p9) target = $region8
    $region5: #{tpu_custom_call.1} parent=1 // loop_body
      %s13 = ssub.s32 %s8, 1
      %s14 = ssub.s32 %s8, 2
      %s15 = sadd.s32 %s8, 1
      %s16 = ssub.s32 %s8, %s15
      %p17 = scmp.eq.s32.totalorder %s16, 0
      %s19 = sadd.s32 %s18, 1
      %s20 = scalar_select %p17, %s18, %s19
      %p23 = pneg %p17
      %p24 = scmp.eq.s32.totalorder %s8, 3
      %p25 = por %p23, %p24
      %p26 = scmp.ne.s32.totalorder %s18, %s21
      %p27 = scmp.eq.s32.totalorder %s8, 0
      %p28 = por %p26, %p27
      %p29 = scmp.ne.s32.totalorder %s18, %s21
      %p30 = scmp.eq.s32.totalorder %s13, 3
      %p31 = por %p29, %p30
      %p32 = scmp.ne.s32.totalorder %s21, %s22
      %p33 = scmp.eq.s32.totalorder %s13, 0
      %p34 = por %p32, %p33
      %p35 = scmp.ne.s32.totalorder %s21, %s22
      %p36 = scmp.eq.s32.totalorder %s14, 3
      %p37 = por %p35, %p36
      %p39 = scmp.ne.s32.totalorder %s22, %s38
      %p40 = scmp.eq.s32.totalorder %s14, 0
      %p41 = por %p39, %p40
      %s42 = ssub.s32 %s8, %s15
      %p43 = scmp.eq.s32.totalorder %s42, 0
      %s45 = sadd.s32 %s44, 1
      %s46 = scalar_select %p43, %s44, %s45
      %p49 = pneg %p43
      %p50 = scmp.eq.s32.totalorder %s8, 3
      %p51 = por %p49, %p50
      %p52 = scmp.ne.s32.totalorder %s44, %s47
      %p53 = scmp.eq.s32.totalorder %s8, 0
      %p54 = por %p52, %p53
      %p55 = scmp.ne.s32.totalorder %s44, %s47
      %p56 = scmp.eq.s32.totalorder %s13, 3
      %p57 = por %p55, %p56
      %p58 = scmp.ne.s32.totalorder %s47, %s48
      %p59 = scmp.eq.s32.totalorder %s13, 0
      %p60 = por %p58, %p59
      %p61 = scmp.ne.s32.totalorder %s47, %s48
      %p62 = scmp.eq.s32.totalorder %s14, 3
      %p63 = por %p61, %p62
      %p65 = scmp.ne.s32.totalorder %s48, %s64
      %p66 = scmp.eq.s32.totalorder %s14, 0
      %p67 = por %p65, %p66
      %s68 = ssub.s32 %s8, %s15
      %p69 = scmp.eq.s32.totalorder %s68, 0
      %s71 = sadd.s32 %s70, 1
      %s72 = scalar_select %p69, %s70, %s71
      %p75 = pneg %p69
      %p76 = scmp.eq.s32.totalorder %s8, 3
      %p77 = por %p75, %p76
      %p78 = scmp.ne.s32.totalorder %s70, %s73
      %p79 = scmp.eq.s32.totalorder %s8, 0
      %p80 = por %p78, %p79
      %p81 = scmp.ne.s32.totalorder %s70, %s73
      %p82 = scmp.eq.s32.totalorder %s13, 3
      %p83 = por %p81, %p82
      %p84 = scmp.ne.s32.totalorder %s73, %s74
      %p85 = scmp.eq.s32.totalorder %s13, 0
      %p86 = por %p84, %p85
      %p87 = scmp.ne.s32.totalorder %s73, %s74
      %p88 = scmp.eq.s32.totalorder %s14, 3
      %p89 = por %p87, %p88
      %p91 = scmp.ne.s32.totalorder %s74, %s90
      %p92 = scmp.eq.s32.totalorder %s14, 0
      %p93 = por %p91, %p92
      %p94 = scmp.le.s32.totalorder 1, %s8
      %p95 = scmp.lt.s32.totalorder %s8, 5
      %p96 = pnand %p94, %p95
      %p97 = pneg %p96
      // Predicated region
      $region9: #{tpu_custom_call.1} parent=5 // pred_check
        _
      $region10: #{tpu_custom_call.1} parent=5 // pred_check_branch
        %99 = sbr.rel (%p96) target = $region12
      $region11: #{tpu_custom_call.1} parent=5 // pred_region
        %s100 = ssub.s32 %s8, 1
      $region12: #{tpu_custom_call.1} parent=5 // pred_fallthru
        _
      %p101 = scmp.lt.s32.totalorder %s8, 4
      // Predicated region
      $region13: #{tpu_custom_call.1} parent=5 // pred_check
        %p102 = pneg %p101
      $region14: #{tpu_custom_call.1} parent=5 // pred_check_branch
        %104 = sbr.rel (%p102) target = $region16
      $region15: #{tpu_custom_call.1} parent=5 // pred_region
        // Predicated region
        $region17: #{tpu_custom_call.1} parent=15 // pred_check
          %p105 = pneg %p28
        $region18: #{tpu_custom_call.1} parent=15 // pred_check_branch
          %107 = sbr.rel (%p105) target = $region20
        $region19: #{tpu_custom_call.1} parent=15 // pred_region
          %s108 = smul.u32 91, %s8
          %s109 = ssub.s32 363, %s108
          %p110 = scmp.lt.s32.totalorder %s109, 91
          %s111 = scalar_select %p110, %s109, 91
          %s112 = smul.u32 128, %s111
          %p113 = scmp.lt.s32.totalorder %s108, 362
          %s114 = scalar_select %p113, %s108, 362
          %s115 = smul.addr %s114, 8
          %s116 = scalar_lea.vmem %s0, %s115
          %s117 = smul.u32 91, %s8
          %s118 = ssub.s32 363, %s117
          %p119 = scmp.lt.s32.totalorder %s118, 91
          %s120 = scalar_select %p119, %s118, 91
          %s121 = smul.u32 128, %s120
        $region20: #{tpu_custom_call.1} parent=15 // pred_fallthru
          _
        // Predicated region
        $region21: #{tpu_custom_call.1} parent=15 // pred_check
          %p122 = pneg %p54
        $region22: #{tpu_custom_call.1} parent=15 // pred_check_branch
          %124 = sbr.rel (%p122) target = $region24
        $region23: #{tpu_custom_call.1} parent=15 // pred_region
          %s125 = smul.u32 91, %s8
          %s126 = ssub.s32 363, %s125
          %p127 = scmp.lt.s32.totalorder %s126, 91
          %s128 = scalar_select %p127, %s126, 91
          %s129 = smul.u32 128, %s128
          %s130 = smul.u32 %s129, 2
          %p131 = scmp.lt.s32.totalorder %s125, 362
          %s132 = scalar_select %p131, %s125, 362
          %s133 = smul.addr %s132, 2
          %s134 = smul.addr %s133, 8
          %s135 = scalar_lea.vmem %s1, %s134
          %s136 = smul.u32 91, %s8
          %s137 = ssub.s32 363, %s136
          %p138 = scmp.lt.s32.totalorder %s137, 91
          %s139 = scalar_select %p138, %s137, 91
          %s140 = smul.u32 128, %s139
          %s141 = smul.u32 %s140, 2
        $region24: #{tpu_custom_call.1} parent=15 // pred_fallthru
          _
      $region16: #{tpu_custom_call.1} parent=5 // pred_fallthru
        _
      %p142 = scmp.le.s32.totalorder 1, %s8
      %p143 = scmp.lt.s32.totalorder %s8, 5
      %p144 = pnand %p142, %p143
      %p145 = pneg %p144
      // Predicated region
      $region25: #{tpu_custom_call.1} parent=5 // pred_check
        _
      $region26: #{tpu_custom_call.1} parent=5 // pred_check_branch
        %147 = sbr.rel (%p144) target = $region28
      $region27: #{tpu_custom_call.1} parent=5 // pred_region
        %s148 = ssub.s32 %s8, 1
        %s149 = smul.u32 91, %s13
        %s150 = ssub.s32 363, %s149
        %p151 = scmp.lt.s32.totalorder %s150, 91
        %s152 = scalar_select %p151, %s150, 91
        %s153 = smul.u32 128, %s152
        %p154 = scmp.lt.s32.totalorder %s149, 362
        %s155 = scalar_select %p154, %s149, 362
        %s156 = smul.addr %s155, 8
        %s157 = scalar_lea.vmem %s0, %s156
        %p158 = pneg %p34
        %p159 = pneg %p31
        %s160 = smul.u32 91, %s13
        %s161 = ssub.s32 363, %s160
        %p162 = scmp.lt.s32.totalorder %s161, 91
        %s163 = scalar_select %p162, %s161, 91
        %s164 = smul.u32 128, %s163
        %s165 = smul.u32 %s164, 2
        %p166 = scmp.lt.s32.totalorder %s160, 362
        %s167 = scalar_select %p166, %s160, 362
        %s168 = smul.addr %s167, 2
        %s169 = smul.addr %s168, 8
        %s170 = scalar_lea.vmem %s1, %s169
        %p171 = pneg %p60
        %p172 = pneg %p57
        %p173 = pneg %p86
        %p174 = pneg %p83
        %s175 = sand.u32 %s73, 1
        %s176 = sand.u32 %s73, 1
        %s177 = smul.addr %s176, 1456
        %s178 = scalar_lea.vmem [#allocation2], %s177
        %s179 = smul.u32 91, %s13
        %s180 = ssub.s32 363, %s179
        %p181 = scmp.lt.s32.totalorder %s180, 91
        %s182 = scalar_select %p181, %s180, 91
        %s183 = smul.u32 128, %s182
        %p184 = scmp.lt.s32.totalorder %s179, 362
        %s185 = scalar_select %p184, %s179, 362
        %s186 = smul.addr %s185, 8
        %s187 = scalar_lea.vmem %s0, %s186
        %s188 = smul.u32 91, %s13
        %s189 = ssub.s32 363, %s188
        %p190 = scmp.lt.s32.totalorder %s189, 91
        %s191 = scalar_select %p190, %s189, 91
        %s192 = smul.u32 128, %s191
        %s193 = smul.u32 91, %s13
        %s194 = ssub.s32 363, %s193
        %p195 = scmp.lt.s32.totalorder %s194, 91
        %s196 = scalar_select %p195, %s194, 91
        %s197 = smul.u32 128, %s196
        %s198 = smul.u32 %s197, 2
        %p199 = scmp.lt.s32.totalorder %s193, 362
        %s200 = scalar_select %p199, %s193, 362
        %s201 = smul.addr %s200, 2
        %s202 = smul.addr %s201, 8
        %s203 = scalar_lea.vmem %s1, %s202
        %s204 = smul.u32 91, %s13
        %s205 = ssub.s32 363, %s204
        %p206 = scmp.lt.s32.totalorder %s205, 91
        %s207 = scalar_select %p206, %s205, 91
        %s208 = smul.u32 128, %s207
        %s209 = smul.u32 %s208, 2
        %s210 = smul.u32 91, %s13
        %s211 = ssub.s32 363, %s210
        %p212 = scmp.lt.s32.totalorder %s211, 91
        %s213 = scalar_select %p212, %s211, 91
        %s214 = smul.u32 128, %s213
        %s215 = smul.u32 %s214, 2
        %v216 = vld [vmem:[%s187] sm:$0xff]
        %v217 = vld [vmem:[%s187 + $0x8] sm:$0xff]
        %v218 = vld [vmem:[%s187 + $0x10] sm:$0xff]
        %v219 = vld [vmem:[%s187 + $0x18] sm:$0xff]
        %v220 = vld [vmem:[%s187 + $0x20] sm:$0xff]
        %v221 = vld [vmem:[%s187 + $0x28] sm:$0xff]
        %v222 = vld [vmem:[%s187 + $0x30] sm:$0xff]
        %v223 = vld [vmem:[%s187 + $0x38] sm:$0xff]
        %v224 = vld [vmem:[%s187 + $0x40] sm:$0xff]
        %v225 = vld [vmem:[%s187 + $0x48] sm:$0xff]
        %v226 = vld [vmem:[%s187 + $0x50] sm:$0xff]
        %v227 = vld [vmem:[%s187 + $0x58] sm:$0xff]
        %v228 = vld [vmem:[%s187 + $0x60] sm:$0xff]
        %v229 = vld [vmem:[%s187 + $0x68] sm:$0xff]
        %v230 = vld [vmem:[%s187 + $0x70] sm:$0xff]
        %v231 = vld [vmem:[%s187 + $0x78] sm:$0xff]
        %v232 = vld [vmem:[%s187 + $0x80] sm:$0xff]
        %v233 = vld [vmem:[%s187 + $0x88] sm:$0xff]
        %v234 = vld [vmem:[%s187 + $0x90] sm:$0xff]
        %v235 = vld [vmem:[%s187 + $0x98] sm:$0xff]
        %v236 = vld [vmem:[%s187 + $0xa0] sm:$0xff]
        %v237 = vld [vmem:[%s187 + $0xa8] sm:$0xff]
        %v238 = vld [vmem:[%s187 + $0xb0] sm:$0xff]
        %v239 = vld [vmem:[%s187 + $0xb8] sm:$0xff]
        %v240 = vld [vmem:[%s187 + $0xc0] sm:$0xff]
        %v241 = vld [vmem:[%s187 + $0xc8] sm:$0xff]
        %v242 = vld [vmem:[%s187 + $0xd0] sm:$0xff]
        %v243 = vld [vmem:[%s187 + $0xd8] sm:$0xff]
        %v244 = vld [vmem:[%s187 + $0xe0] sm:$0xff]
        %v245 = vld [vmem:[%s187 + $0xe8] sm:$0xff]
        %v246 = vld [vmem:[%s187 + $0xf0] sm:$0xff]
        %v247 = vld [vmem:[%s187 + $0xf8] sm:$0xff]
        %v248 = vld [vmem:[%s187 + $0x100] sm:$0xff]
        %v249 = vld [vmem:[%s187 + $0x108] sm:$0xff]
        %v250 = vld [vmem:[%s187 + $0x110] sm:$0xff]
        %v251 = vld [vmem:[%s187 + $0x118] sm:$0xff]
        %v252 = vld [vmem:[%s187 + $0x120] sm:$0xff]
        %v253 = vld [vmem:[%s187 + $0x128] sm:$0xff]
        %v254 = vld [vmem:[%s187 + $0x130] sm:$0xff]
        %v255 = vld [vmem:[%s187 + $0x138] sm:$0xff]
        %v256 = vld [vmem:[%s187 + $0x140] sm:$0xff]
        %v257 = vld [vmem:[%s187 + $0x148] sm:$0xff]
        %v258 = vld [vmem:[%s187 + $0x150] sm:$0xff]
        %v259 = vld [vmem:[%s187 + $0x158] sm:$0xff]
        %v260 = vld [vmem:[%s187 + $0x160] sm:$0xff]
        %v261 = vld [vmem:[%s187 + $0x168] sm:$0xff]
        %v262 = vld [vmem:[%s187 + $0x170] sm:$0xff]
        %v263 = vld [vmem:[%s187 + $0x178] sm:$0xff]
        %v264 = vld [vmem:[%s187 + $0x180] sm:$0xff]
        %v265 = vld [vmem:[%s187 + $0x188] sm:$0xff]
        %v266 = vld [vmem:[%s187 + $0x190] sm:$0xff]
        %v267 = vld [vmem:[%s187 + $0x198] sm:$0xff]
        %v268 = vld [vmem:[%s187 + $0x1a0] sm:$0xff]
        %v269 = vld [vmem:[%s187 + $0x1a8] sm:$0xff]
        %v270 = vld [vmem:[%s187 + $0x1b0] sm:$0xff]
        %v271 = vld [vmem:[%s187 + $0x1b8] sm:$0xff]
        %v272 = vld [vmem:[%s187 + $0x1c0] sm:$0xff]
        %v273 = vld [vmem:[%s187 + $0x1c8] sm:$0xff]
        %v274 = vld [vmem:[%s187 + $0x1d0] sm:$0xff]
        %v275 = vld [vmem:[%s187 + $0x1d8] sm:$0xff]
        %v276 = vld [vmem:[%s187 + $0x1e0] sm:$0xff]
        %v277 = vld [vmem:[%s187 + $0x1e8] sm:$0xff]
        %v278 = vld [vmem:[%s187 + $0x1f0] sm:$0xff]
        %v279 = vld [vmem:[%s187 + $0x1f8] sm:$0xff]
        %v280 = vld [vmem:[%s187 + $0x200] sm:$0xff]
        %v281 = vld [vmem:[%s187 + $0x208] sm:$0xff]
        %v282 = vld [vmem:[%s187 + $0x210] sm:$0xff]
        %v283 = vld [vmem:[%s187 + $0x218] sm:$0xff]
        %v284 = vld [vmem:[%s187 + $0x220] sm:$0xff]
        %v285 = vld [vmem:[%s187 + $0x228] sm:$0xff]
        %v286 = vld [vmem:[%s187 + $0x230] sm:$0xff]
        %v287 = vld [vmem:[%s187 + $0x238] sm:$0xff]
        %v288 = vld [vmem:[%s187 + $0x240] sm:$0xff]
        %v289 = vld [vmem:[%s187 + $0x248] sm:$0xff]
        %v290 = vld [vmem:[%s187 + $0x250] sm:$0xff]
        %v291 = vld [vmem:[%s187 + $0x258] sm:$0xff]
        %v292 = vld [vmem:[%s187 + $0x260] sm:$0xff]
        %v293 = vld [vmem:[%s187 + $0x268] sm:$0xff]
        %v294 = vld [vmem:[%s187 + $0x270] sm:$0xff]
        %v295 = vld [vmem:[%s187 + $0x278] sm:$0xff]
        %v296 = vld [vmem:[%s187 + $0x280] sm:$0xff]
        %v297 = vld [vmem:[%s187 + $0x288] sm:$0xff]
        %v298 = vld [vmem:[%s187 + $0x290] sm:$0xff]
        %v299 = vld [vmem:[%s187 + $0x298] sm:$0xff]
        %v300 = vld [vmem:[%s187 + $0x2a0] sm:$0xff]
        %v301 = vld [vmem:[%s187 + $0x2a8] sm:$0xff]
        %v302 = vld [vmem:[%s187 + $0x2b0] sm:$0xff]
        %v303 = vld [vmem:[%s187 + $0x2b8] sm:$0xff]
        %v304 = vld [vmem:[%s187 + $0x2c0] sm:$0xff]
        %v305 = vld [vmem:[%s187 + $0x2c8] sm:$0xff]
        %v306 = vld [vmem:[%s187 + $0x2d0] sm:$0xff]
        %v307 = vld [vmem:[%s203] sm:$0xff]
        %v308 = vld [vmem:[%s203 + $0x8] sm:$0xff]
        %v309 = vld [vmem:[%s203 + $0x10] sm:$0xff]
        %v310 = vld [vmem:[%s203 + $0x18] sm:$0xff]
        %v311 = vld [vmem:[%s203 + $0x20] sm:$0xff]
        %v312 = vld [vmem:[%s203 + $0x28] sm:$0xff]
        %v313 = vld [vmem:[%s203 + $0x30] sm:$0xff]
        %v314 = vld [vmem:[%s203 + $0x38] sm:$0xff]
        %v315 = vld [vmem:[%s203 + $0x40] sm:$0xff]
        %v316 = vld [vmem:[%s203 + $0x48] sm:$0xff]
        %v317 = vld [vmem:[%s203 + $0x50] sm:$0xff]
        %v318 = vld [vmem:[%s203 + $0x58] sm:$0xff]
        %v319 = vld [vmem:[%s203 + $0x60] sm:$0xff]
        %v320 = vld [vmem:[%s203 + $0x68] sm:$0xff]
        %v321 = vld [vmem:[%s203 + $0x70] sm:$0xff]
        %v322 = vld [vmem:[%s203 + $0x78] sm:$0xff]
        %v323 = vld [vmem:[%s203 + $0x80] sm:$0xff]
        %v324 = vld [vmem:[%s203 + $0x88] sm:$0xff]
        %v325 = vld [vmem:[%s203 + $0x90] sm:$0xff]
        %v326 = vld [vmem:[%s203 + $0x98] sm:$0xff]
        %v327 = vld [vmem:[%s203 + $0xa0] sm:$0xff]
        %v328 = vld [vmem:[%s203 + $0xa8] sm:$0xff]
        %v329 = vld [vmem:[%s203 + $0xb0] sm:$0xff]
        %v330 = vld [vmem:[%s203 + $0xb8] sm:$0xff]
        %v331 = vld [vmem:[%s203 + $0xc0] sm:$0xff]
        %v332 = vld [vmem:[%s203 + $0xc8] sm:$0xff]
        %v333 = vld [vmem:[%s203 + $0xd0] sm:$0xff]
        %v334 = vld [vmem:[%s203 + $0xd8] sm:$0xff]
        %v335 = vld [vmem:[%s203 + $0xe0] sm:$0xff]
        %v336 = vld [vmem:[%s203 + $0xe8] sm:$0xff]
        %v337 = vld [vmem:[%s203 + $0xf0] sm:$0xff]
        %v338 = vld [vmem:[%s203 + $0xf8] sm:$0xff]
        %v339 = vld [vmem:[%s203 + $0x100] sm:$0xff]
        %v340 = vld [vmem:[%s203 + $0x108] sm:$0xff]
        %v341 = vld [vmem:[%s203 + $0x110] sm:$0xff]
        %v342 = vld [vmem:[%s203 + $0x118] sm:$0xff]
        %v343 = vld [vmem:[%s203 + $0x120] sm:$0xff]
        %v344 = vld [vmem:[%s203 + $0x128] sm:$0xff]
        %v345 = vld [vmem:[%s203 + $0x130] sm:$0xff]
        %v346 = vld [vmem:[%s203 + $0x138] sm:$0xff]
        %v347 = vld [vmem:[%s203 + $0x140] sm:$0xff]
        %v348 = vld [vmem:[%s203 + $0x148] sm:$0xff]
        %v349 = vld [vmem:[%s203 + $0x150] sm:$0xff]
        %v350 = vld [vmem:[%s203 + $0x158] sm:$0xff]
        %v351 = vld [vmem:[%s203 + $0x160] sm:$0xff]
        %v352 = vld [vmem:[%s203 + $0x168] sm:$0xff]
        %v353 = vld [vmem:[%s203 + $0x170] sm:$0xff]
        %v354 = vld [vmem:[%s203 + $0x178] sm:$0xff]
        %v355 = vld [vmem:[%s203 + $0x180] sm:$0xff]
        %v356 = vld [vmem:[%s203 + $0x188] sm:$0xff]
        %v357 = vld [vmem:[%s203 + $0x190] sm:$0xff]
        %v358 = vld [vmem:[%s203 + $0x198] sm:$0xff]
        %v359 = vld [vmem:[%s203 + $0x1a0] sm:$0xff]
        %v360 = vld [vmem:[%s203 + $0x1a8] sm:$0xff]
        %v361 = vld [vmem:[%s203 + $0x1b0] sm:$0xff]
        %v362 = vld [vmem:[%s203 + $0x1b8] sm:$0xff]
        %v363 = vld [vmem:[%s203 + $0x1c0] sm:$0xff]
        %v364 = vld [vmem:[%s203 + $0x1c8] sm:$0xff]
        %v365 = vld [vmem:[%s203 + $0x1d0] sm:$0xff]
        %v366 = vld [vmem:[%s203 + $0x1d8] sm:$0xff]
        %v367 = vld [vmem:[%s203 + $0x1e0] sm:$0xff]
        %v368 = vld [vmem:[%s203 + $0x1e8] sm:$0xff]
        %v369 = vld [vmem:[%s203 + $0x1f0] sm:$0xff]
        %v370 = vld [vmem:[%s203 + $0x1f8] sm:$0xff]
        %v371 = vld [vmem:[%s203 + $0x200] sm:$0xff]
        %v372 = vld [vmem:[%s203 + $0x208] sm:$0xff]
        %v373 = vld [vmem:[%s203 + $0x210] sm:$0xff]
        %v374 = vld [vmem:[%s203 + $0x218] sm:$0xff]
        %v375 = vld [vmem:[%s203 + $0x220] sm:$0xff]
        %v376 = vld [vmem:[%s203 + $0x228] sm:$0xff]
        %v377 = vld [vmem:[%s203 + $0x230] sm:$0xff]
        %v378 = vld [vmem:[%s203 + $0x238] sm:$0xff]
        %v379 = vld [vmem:[%s203 + $0x240] sm:$0xff]
        %v380 = vld [vmem:[%s203 + $0x248] sm:$0xff]
        %v381 = vld [vmem:[%s203 + $0x250] sm:$0xff]
        %v382 = vld [vmem:[%s203 + $0x258] sm:$0xff]
        %v383 = vld [vmem:[%s203 + $0x260] sm:$0xff]
        %v384 = vld [vmem:[%s203 + $0x268] sm:$0xff]
        %v385 = vld [vmem:[%s203 + $0x270] sm:$0xff]
        %v386 = vld [vmem:[%s203 + $0x278] sm:$0xff]
        %v387 = vld [vmem:[%s203 + $0x280] sm:$0xff]
        %v388 = vld [vmem:[%s203 + $0x288] sm:$0xff]
        %v389 = vld [vmem:[%s203 + $0x290] sm:$0xff]
        %v390 = vld [vmem:[%s203 + $0x298] sm:$0xff]
        %v391 = vld [vmem:[%s203 + $0x2a0] sm:$0xff]
        %v392 = vld [vmem:[%s203 + $0x2a8] sm:$0xff]
        %v393 = vld [vmem:[%s203 + $0x2b0] sm:$0xff]
        %v394 = vld [vmem:[%s203 + $0x2b8] sm:$0xff]
        %v395 = vld [vmem:[%s203 + $0x2c0] sm:$0xff]
        %v396 = vld [vmem:[%s203 + $0x2c8] sm:$0xff]
        %v397 = vld [vmem:[%s203 + $0x2d0] sm:$0xff]
        %v398 = vld [vmem:[%s203 + $0x2d8] sm:$0xff]
        %v399 = vld [vmem:[%s203 + $0x2e0] sm:$0xff]
        %v400 = vld [vmem:[%s203 + $0x2e8] sm:$0xff]
        %v401 = vld [vmem:[%s203 + $0x2f0] sm:$0xff]
        %v402 = vld [vmem:[%s203 + $0x2f8] sm:$0xff]
        %v403 = vld [vmem:[%s203 + $0x300] sm:$0xff]
        %v404 = vld [vmem:[%s203 + $0x308] sm:$0xff]
        %v405 = vld [vmem:[%s203 + $0x310] sm:$0xff]
        %v406 = vld [vmem:[%s203 + $0x318] sm:$0xff]
        %v407 = vld [vmem:[%s203 + $0x320] sm:$0xff]
        %v408 = vld [vmem:[%s203 + $0x328] sm:$0xff]
        %v409 = vld [vmem:[%s203 + $0x330] sm:$0xff]
        %v410 = vld [vmem:[%s203 + $0x338] sm:$0xff]
        %v411 = vld [vmem:[%s203 + $0x340] sm:$0xff]
        %v412 = vld [vmem:[%s203 + $0x348] sm:$0xff]
        %v413 = vld [vmem:[%s203 + $0x350] sm:$0xff]
        %v414 = vld [vmem:[%s203 + $0x358] sm:$0xff]
        %v415 = vld [vmem:[%s203 + $0x360] sm:$0xff]
        %v416 = vld [vmem:[%s203 + $0x368] sm:$0xff]
        %v417 = vld [vmem:[%s203 + $0x370] sm:$0xff]
        %v418 = vld [vmem:[%s203 + $0x378] sm:$0xff]
        %v419 = vld [vmem:[%s203 + $0x380] sm:$0xff]
        %v420 = vld [vmem:[%s203 + $0x388] sm:$0xff]
        %v421 = vld [vmem:[%s203 + $0x390] sm:$0xff]
        %v422 = vld [vmem:[%s203 + $0x398] sm:$0xff]
        %v423 = vld [vmem:[%s203 + $0x3a0] sm:$0xff]
        %v424 = vld [vmem:[%s203 + $0x3a8] sm:$0xff]
        %v425 = vld [vmem:[%s203 + $0x3b0] sm:$0xff]
        %v426 = vld [vmem:[%s203 + $0x3b8] sm:$0xff]
        %v427 = vld [vmem:[%s203 + $0x3c0] sm:$0xff]
        %v428 = vld [vmem:[%s203 + $0x3c8] sm:$0xff]
        %v429 = vld [vmem:[%s203 + $0x3d0] sm:$0xff]
        %v430 = vld [vmem:[%s203 + $0x3d8] sm:$0xff]
        %v431 = vld [vmem:[%s203 + $0x3e0] sm:$0xff]
        %v432 = vld [vmem:[%s203 + $0x3e8] sm:$0xff]
        %v433 = vld [vmem:[%s203 + $0x3f0] sm:$0xff]
        %v434 = vld [vmem:[%s203 + $0x3f8] sm:$0xff]
        %v435 = vld [vmem:[%s203 + $0x400] sm:$0xff]
        %v436 = vld [vmem:[%s203 + $0x408] sm:$0xff]
        %v437 = vld [vmem:[%s203 + $0x410] sm:$0xff]
        %v438 = vld [vmem:[%s203 + $0x418] sm:$0xff]
        %v439 = vld [vmem:[%s203 + $0x420] sm:$0xff]
        %v440 = vld [vmem:[%s203 + $0x428] sm:$0xff]
        %v441 = vld [vmem:[%s203 + $0x430] sm:$0xff]
        %v442 = vld [vmem:[%s203 + $0x438] sm:$0xff]
        %v443 = vld [vmem:[%s203 + $0x440] sm:$0xff]
        %v444 = vld [vmem:[%s203 + $0x448] sm:$0xff]
        %v445 = vld [vmem:[%s203 + $0x450] sm:$0xff]
        %v446 = vld [vmem:[%s203 + $0x458] sm:$0xff]
        %v447 = vld [vmem:[%s203 + $0x460] sm:$0xff]
        %v448 = vld [vmem:[%s203 + $0x468] sm:$0xff]
        %v449 = vld [vmem:[%s203 + $0x470] sm:$0xff]
        %v450 = vld [vmem:[%s203 + $0x478] sm:$0xff]
        %v451 = vld [vmem:[%s203 + $0x480] sm:$0xff]
        %v452 = vld [vmem:[%s203 + $0x488] sm:$0xff]
        %v453 = vld [vmem:[%s203 + $0x490] sm:$0xff]
        %v454 = vld [vmem:[%s203 + $0x498] sm:$0xff]
        %v455 = vld [vmem:[%s203 + $0x4a0] sm:$0xff]
        %v456 = vld [vmem:[%s203 + $0x4a8] sm:$0xff]
        %v457 = vld [vmem:[%s203 + $0x4b0] sm:$0xff]
        %v458 = vld [vmem:[%s203 + $0x4b8] sm:$0xff]
        %v459 = vld [vmem:[%s203 + $0x4c0] sm:$0xff]
        %v460 = vld [vmem:[%s203 + $0x4c8] sm:$0xff]
        %v461 = vld [vmem:[%s203 + $0x4d0] sm:$0xff]
        %v462 = vld [vmem:[%s203 + $0x4d8] sm:$0xff]
        %v463 = vld [vmem:[%s203 + $0x4e0] sm:$0xff]
        %v464 = vld [vmem:[%s203 + $0x4e8] sm:$0xff]
        %v465 = vld [vmem:[%s203 + $0x4f0] sm:$0xff]
        %v466 = vld [vmem:[%s203 + $0x4f8] sm:$0xff]
        %v467 = vld [vmem:[%s203 + $0x500] sm:$0xff]
        %v468 = vld [vmem:[%s203 + $0x508] sm:$0xff]
        %v469 = vld [vmem:[%s203 + $0x510] sm:$0xff]
        %v470 = vld [vmem:[%s203 + $0x518] sm:$0xff]
        %v471 = vld [vmem:[%s203 + $0x520] sm:$0xff]
        %v472 = vld [vmem:[%s203 + $0x528] sm:$0xff]
        %v473 = vld [vmem:[%s203 + $0x530] sm:$0xff]
        %v474 = vld [vmem:[%s203 + $0x538] sm:$0xff]
        %v475 = vld [vmem:[%s203 + $0x540] sm:$0xff]
        %v476 = vld [vmem:[%s203 + $0x548] sm:$0xff]
        %v477 = vld [vmem:[%s203 + $0x550] sm:$0xff]
        %v478 = vld [vmem:[%s203 + $0x558] sm:$0xff]
        %v479 = vld [vmem:[%s203 + $0x560] sm:$0xff]
        %v480 = vld [vmem:[%s203 + $0x568] sm:$0xff]
        %v481 = vld [vmem:[%s203 + $0x570] sm:$0xff]
        %v482 = vld [vmem:[%s203 + $0x578] sm:$0xff]
        %v483 = vld [vmem:[%s203 + $0x580] sm:$0xff]
        %v484 = vld [vmem:[%s203 + $0x588] sm:$0xff]
        %v485 = vld [vmem:[%s203 + $0x590] sm:$0xff]
        %v486 = vld [vmem:[%s203 + $0x598] sm:$0xff]
        %v487 = vld [vmem:[%s203 + $0x5a0] sm:$0xff]
        %v488 = vld [vmem:[%s203 + $0x5a8] sm:$0xff]
        %490 = vset.pattern.permute.xlu0 0
        %491 = vperm.xlu0 %490, %v216
        %v492 = vpop.permute.xlu0 %491
        %495 = vset.pattern.permute.xlu0 0
        %496 = vperm.xlu0 %495, %v217
        %v497 = vpop.permute.xlu0 %496
        %500 = vset.pattern.permute.xlu0 0
        %501 = vperm.xlu0 %500, %v218
        %v502 = vpop.permute.xlu0 %501
        %505 = vset.pattern.permute.xlu0 0
        %506 = vperm.xlu0 %505, %v219
        %v507 = vpop.permute.xlu0 %506
        %510 = vset.pattern.permute.xlu0 0
        %511 = vperm.xlu0 %510, %v220
        %v512 = vpop.permute.xlu0 %511
        %515 = vset.pattern.permute.xlu0 0
        %516 = vperm.xlu0 %515, %v221
        %v517 = vpop.permute.xlu0 %516
        %520 = vset.pattern.permute.xlu0 0
        %521 = vperm.xlu0 %520, %v222
        %v522 = vpop.permute.xlu0 %521
        %525 = vset.pattern.permute.xlu0 0
        %526 = vperm.xlu0 %525, %v223
        %v527 = vpop.permute.xlu0 %526
        %530 = vset.pattern.permute.xlu0 0
        %531 = vperm.xlu0 %530, %v224
        %v532 = vpop.permute.xlu0 %531
        %535 = vset.pattern.permute.xlu0 0
        %536 = vperm.xlu0 %535, %v225
        %v537 = vpop.permute.xlu0 %536
        %540 = vset.pattern.permute.xlu0 0
        %541 = vperm.xlu0 %540, %v226
        %v542 = vpop.permute.xlu0 %541
        %545 = vset.pattern.permute.xlu0 0
        %546 = vperm.xlu0 %545, %v227
        %v547 = vpop.permute.xlu0 %546
        %550 = vset.pattern.permute.xlu0 0
        %551 = vperm.xlu0 %550, %v228
        %v552 = vpop.permute.xlu0 %551
        %555 = vset.pattern.permute.xlu0 0
        %556 = vperm.xlu0 %555, %v229
        %v557 = vpop.permute.xlu0 %556
        %560 = vset.pattern.permute.xlu0 0
        %561 = vperm.xlu0 %560, %v230
        %v562 = vpop.permute.xlu0 %561
        %565 = vset.pattern.permute.xlu0 0
        %566 = vperm.xlu0 %565, %v231
        %v567 = vpop.permute.xlu0 %566
        %570 = vset.pattern.permute.xlu0 0
        %571 = vperm.xlu0 %570, %v232
        %v572 = vpop.permute.xlu0 %571
        %575 = vset.pattern.permute.xlu0 0
        %576 = vperm.xlu0 %575, %v233
        %v577 = vpop.permute.xlu0 %576
        %580 = vset.pattern.permute.xlu0 0
        %581 = vperm.xlu0 %580, %v234
        %v582 = vpop.permute.xlu0 %581
        %585 = vset.pattern.permute.xlu0 0
        %586 = vperm.xlu0 %585, %v235
        %v587 = vpop.permute.xlu0 %586
        %590 = vset.pattern.permute.xlu0 0
        %591 = vperm.xlu0 %590, %v236
        %v592 = vpop.permute.xlu0 %591
        %595 = vset.pattern.permute.xlu0 0
        %596 = vperm.xlu0 %595, %v237
        %v597 = vpop.permute.xlu0 %596
        %600 = vset.pattern.permute.xlu0 0
        %601 = vperm.xlu0 %600, %v238
        %v602 = vpop.permute.xlu0 %601
        %605 = vset.pattern.permute.xlu0 0
        %606 = vperm.xlu0 %605, %v239
        %v607 = vpop.permute.xlu0 %606
        %610 = vset.pattern.permute.xlu0 0
        %611 = vperm.xlu0 %610, %v240
        %v612 = vpop.permute.xlu0 %611
        %615 = vset.pattern.permute.xlu0 0
        %616 = vperm.xlu0 %615, %v241
        %v617 = vpop.permute.xlu0 %616
        %620 = vset.pattern.permute.xlu0 0
        %621 = vperm.xlu0 %620, %v242
        %v622 = vpop.permute.xlu0 %621
        %625 = vset.pattern.permute.xlu0 0
        %626 = vperm.xlu0 %625, %v243
        %v627 = vpop.permute.xlu0 %626
        %630 = vset.pattern.permute.xlu0 0
        %631 = vperm.xlu0 %630, %v244
        %v632 = vpop.permute.xlu0 %631
        %635 = vset.pattern.permute.xlu0 0
        %636 = vperm.xlu0 %635, %v245
        %v637 = vpop.permute.xlu0 %636
        %640 = vset.pattern.permute.xlu0 0
        %641 = vperm.xlu0 %640, %v246
        %v642 = vpop.permute.xlu0 %641
        %645 = vset.pattern.permute.xlu0 0
        %646 = vperm.xlu0 %645, %v247
        %v647 = vpop.permute.xlu0 %646
        %650 = vset.pattern.permute.xlu0 0
        %651 = vperm.xlu0 %650, %v248
        %v652 = vpop.permute.xlu0 %651
        %655 = vset.pattern.permute.xlu0 0
        %656 = vperm.xlu0 %655, %v249
        %v657 = vpop.permute.xlu0 %656
        %660 = vset.pattern.permute.xlu0 0
        %661 = vperm.xlu0 %660, %v250
        %v662 = vpop.permute.xlu0 %661
        %665 = vset.pattern.permute.xlu0 0
        %666 = vperm.xlu0 %665, %v251
        %v667 = vpop.permute.xlu0 %666
        %670 = vset.pattern.permute.xlu0 0
        %671 = vperm.xlu0 %670, %v252
        %v672 = vpop.permute.xlu0 %671
        %675 = vset.pattern.permute.xlu0 0
        %676 = vperm.xlu0 %675, %v253
        %v677 = vpop.permute.xlu0 %676
        %680 = vset.pattern.permute.xlu0 0
        %681 = vperm.xlu0 %680, %v254
        %v682 = vpop.permute.xlu0 %681
        %685 = vset.pattern.permute.xlu0 0
        %686 = vperm.xlu0 %685, %v255
        %v687 = vpop.permute.xlu0 %686
        %690 = vset.pattern.permute.xlu0 0
        %691 = vperm.xlu0 %690, %v256
        %v692 = vpop.permute.xlu0 %691
        %695 = vset.pattern.permute.xlu0 0
        %696 = vperm.xlu0 %695, %v257
        %v697 = vpop.permute.xlu0 %696
        %700 = vset.pattern.permute.xlu0 0
        %701 = vperm.xlu0 %700, %v258
        %v702 = vpop.permute.xlu0 %701
        %705 = vset.pattern.permute.xlu0 0
        %706 = vperm.xlu0 %705, %v259
        %v707 = vpop.permute.xlu0 %706
        %710 = vset.pattern.permute.xlu0 0
        %711 = vperm.xlu0 %710, %v260
        %v712 = vpop.permute.xlu0 %711
        %715 = vset.pattern.permute.xlu0 0
        %716 = vperm.xlu0 %715, %v261
        %v717 = vpop.permute.xlu0 %716
        %720 = vset.pattern.permute.xlu0 0
        %721 = vperm.xlu0 %720, %v262
        %v722 = vpop.permute.xlu0 %721
        %725 = vset.pattern.permute.xlu0 0
        %726 = vperm.xlu0 %725, %v263
        %v727 = vpop.permute.xlu0 %726
        %730 = vset.pattern.permute.xlu0 0
        %731 = vperm.xlu0 %730, %v264
        %v732 = vpop.permute.xlu0 %731
        %735 = vset.pattern.permute.xlu0 0
        %736 = vperm.xlu0 %735, %v265
        %v737 = vpop.permute.xlu0 %736
        %740 = vset.pattern.permute.xlu0 0
        %741 = vperm.xlu0 %740, %v266
        %v742 = vpop.permute.xlu0 %741
        %745 = vset.pattern.permute.xlu0 0
        %746 = vperm.xlu0 %745, %v267
        %v747 = vpop.permute.xlu0 %746
        %750 = vset.pattern.permute.xlu0 0
        %751 = vperm.xlu0 %750, %v268
        %v752 = vpop.permute.xlu0 %751
        %755 = vset.pattern.permute.xlu0 0
        %756 = vperm.xlu0 %755, %v269
        %v757 = vpop.permute.xlu0 %756
        %760 = vset.pattern.permute.xlu0 0
        %761 = vperm.xlu0 %760, %v270
        %v762 = vpop.permute.xlu0 %761
        %765 = vset.pattern.permute.xlu0 0
        %766 = vperm.xlu0 %765, %v271
        %v767 = vpop.permute.xlu0 %766
        %770 = vset.pattern.permute.xlu0 0
        %771 = vperm.xlu0 %770, %v272
        %v772 = vpop.permute.xlu0 %771
        %775 = vset.pattern.permute.xlu0 0
        %776 = vperm.xlu0 %775, %v273
        %v777 = vpop.permute.xlu0 %776
        %780 = vset.pattern.permute.xlu0 0
        %781 = vperm.xlu0 %780, %v274
        %v782 = vpop.permute.xlu0 %781
        %785 = vset.pattern.permute.xlu0 0
        %786 = vperm.xlu0 %785, %v275
        %v787 = vpop.permute.xlu0 %786
        %790 = vset.pattern.permute.xlu0 0
        %791 = vperm.xlu0 %790, %v276
        %v792 = vpop.permute.xlu0 %791
        %795 = vset.pattern.permute.xlu0 0
        %796 = vperm.xlu0 %795, %v277
        %v797 = vpop.permute.xlu0 %796
        %800 = vset.pattern.permute.xlu0 0
        %801 = vperm.xlu0 %800, %v278
        %v802 = vpop.permute.xlu0 %801
        %805 = vset.pattern.permute.xlu0 0
        %806 = vperm.xlu0 %805, %v279
        %v807 = vpop.permute.xlu0 %806
        %810 = vset.pattern.permute.xlu0 0
        %811 = vperm.xlu0 %810, %v280
        %v812 = vpop.permute.xlu0 %811
        %815 = vset.pattern.permute.xlu0 0
        %816 = vperm.xlu0 %815, %v281
        %v817 = vpop.permute.xlu0 %816
        %820 = vset.pattern.permute.xlu0 0
        %821 = vperm.xlu0 %820, %v282
        %v822 = vpop.permute.xlu0 %821
        %825 = vset.pattern.permute.xlu0 0
        %826 = vperm.xlu0 %825, %v283
        %v827 = vpop.permute.xlu0 %826
        %830 = vset.pattern.permute.xlu0 0
        %831 = vperm.xlu0 %830, %v284
        %v832 = vpop.permute.xlu0 %831
        %835 = vset.pattern.permute.xlu0 0
        %836 = vperm.xlu0 %835, %v285
        %v837 = vpop.permute.xlu0 %836
        %840 = vset.pattern.permute.xlu0 0
        %841 = vperm.xlu0 %840, %v286
        %v842 = vpop.permute.xlu0 %841
        %845 = vset.pattern.permute.xlu0 0
        %846 = vperm.xlu0 %845, %v287
        %v847 = vpop.permute.xlu0 %846
        %850 = vset.pattern.permute.xlu0 0
        %851 = vperm.xlu0 %850, %v288
        %v852 = vpop.permute.xlu0 %851
        %855 = vset.pattern.permute.xlu0 0
        %856 = vperm.xlu0 %855, %v289
        %v857 = vpop.permute.xlu0 %856
        %860 = vset.pattern.permute.xlu0 0
        %861 = vperm.xlu0 %860, %v290
        %v862 = vpop.permute.xlu0 %861
        %865 = vset.pattern.permute.xlu0 0
        %866 = vperm.xlu0 %865, %v291
        %v867 = vpop.permute.xlu0 %866
        %870 = vset.pattern.permute.xlu0 0
        %871 = vperm.xlu0 %870, %v292
        %v872 = vpop.permute.xlu0 %871
        %875 = vset.pattern.permute.xlu0 0
        %876 = vperm.xlu0 %875, %v293
        %v877 = vpop.permute.xlu0 %876
        %880 = vset.pattern.permute.xlu0 0
        %881 = vperm.xlu0 %880, %v294
        %v882 = vpop.permute.xlu0 %881
        %885 = vset.pattern.permute.xlu0 0
        %886 = vperm.xlu0 %885, %v295
        %v887 = vpop.permute.xlu0 %886
        %890 = vset.pattern.permute.xlu0 0
        %891 = vperm.xlu0 %890, %v296
        %v892 = vpop.permute.xlu0 %891
        %895 = vset.pattern.permute.xlu0 0
        %896 = vperm.xlu0 %895, %v297
        %v897 = vpop.permute.xlu0 %896
        %900 = vset.pattern.permute.xlu0 0
        %901 = vperm.xlu0 %900, %v298
        %v902 = vpop.permute.xlu0 %901
        %905 = vset.pattern.permute.xlu0 0
        %906 = vperm.xlu0 %905, %v299
        %v907 = vpop.permute.xlu0 %906
        %910 = vset.pattern.permute.xlu0 0
        %911 = vperm.xlu0 %910, %v300
        %v912 = vpop.permute.xlu0 %911
        %915 = vset.pattern.permute.xlu0 0
        %916 = vperm.xlu0 %915, %v301
        %v917 = vpop.permute.xlu0 %916
        %920 = vset.pattern.permute.xlu0 0
        %921 = vperm.xlu0 %920, %v302
        %v922 = vpop.permute.xlu0 %921
        %925 = vset.pattern.permute.xlu0 0
        %926 = vperm.xlu0 %925, %v303
        %v927 = vpop.permute.xlu0 %926
        %930 = vset.pattern.permute.xlu0 0
        %931 = vperm.xlu0 %930, %v304
        %v932 = vpop.permute.xlu0 %931
        %935 = vset.pattern.permute.xlu0 0
        %936 = vperm.xlu0 %935, %v305
        %v937 = vpop.permute.xlu0 %936
        %940 = vset.pattern.permute.xlu0 0
        %941 = vperm.xlu0 %940, %v306
        %v942 = vpop.permute.xlu0 %941
        %v944 = vmul.f32 %v492, %v307
        %v945 = vmul.f32 %v492, %v308
        %v946 = vmul.f32 %v497, %v309
        %v947 = vmul.f32 %v497, %v310
        %v948 = vmul.f32 %v502, %v311
        %v949 = vmul.f32 %v502, %v312
        %v950 = vmul.f32 %v507, %v313
        %v951 = vmul.f32 %v507, %v314
        %v952 = vmul.f32 %v512, %v315
        %v953 = vmul.f32 %v512, %v316
        %v954 = vmul.f32 %v517, %v317
        %v955 = vmul.f32 %v517, %v318
        %v956 = vmul.f32 %v522, %v319
        %v957 = vmul.f32 %v522, %v320
        %v958 = vmul.f32 %v527, %v321
        %v959 = vmul.f32 %v527, %v322
        %v960 = vmul.f32 %v532, %v323
        %v961 = vmul.f32 %v532, %v324
        %v962 = vmul.f32 %v537, %v325
        %v963 = vmul.f32 %v537, %v326
        %v964 = vmul.f32 %v542, %v327
        %v965 = vmul.f32 %v542, %v328
        %v966 = vmul.f32 %v547, %v329
        %v967 = vmul.f32 %v547, %v330
        %v968 = vmul.f32 %v552, %v331
        %v969 = vmul.f32 %v552, %v332
        %v970 = vmul.f32 %v557, %v333
        %v971 = vmul.f32 %v557, %v334
        %v972 = vmul.f32 %v562, %v335
        %v973 = vmul.f32 %v562, %v336
        %v974 = vmul.f32 %v567, %v337
        %v975 = vmul.f32 %v567, %v338
        %v976 = vmul.f32 %v572, %v339
        %v977 = vmul.f32 %v572, %v340
        %v978 = vmul.f32 %v577, %v341
        %v979 = vmul.f32 %v577, %v342
        %v980 = vmul.f32 %v582, %v343
        %v981 = vmul.f32 %v582, %v344
        %v982 = vmul.f32 %v587, %v345
        %v983 = vmul.f32 %v587, %v346
        %v984 = vmul.f32 %v592, %v347
        %v985 = vmul.f32 %v592, %v348
        %v986 = vmul.f32 %v597, %v349
        %v987 = vmul.f32 %v597, %v350
        %v988 = vmul.f32 %v602, %v351
        %v989 = vmul.f32 %v602, %v352
        %v990 = vmul.f32 %v607, %v353
        %v991 = vmul.f32 %v607, %v354
        %v992 = vmul.f32 %v612, %v355
        %v993 = vmul.f32 %v612, %v356
        %v994 = vmul.f32 %v617, %v357
        %v995 = vmul.f32 %v617, %v358
        %v996 = vmul.f32 %v622, %v359
        %v997 = vmul.f32 %v622, %v360
        %v998 = vmul.f32 %v627, %v361
        %v999 = vmul.f32 %v627, %v362
        %v1000 = vmul.f32 %v632, %v363
        %v1001 = vmul.f32 %v632, %v364
        %v1002 = vmul.f32 %v637, %v365
        %v1003 = vmul.f32 %v637, %v366
        %v1004 = vmul.f32 %v642, %v367
        %v1005 = vmul.f32 %v642, %v368
        %v1006 = vmul.f32 %v647, %v369
        %v1007 = vmul.f32 %v647, %v370
        %v1008 = vmul.f32 %v652, %v371
        %v1009 = vmul.f32 %v652, %v372
        %v1010 = vmul.f32 %v657, %v373
        %v1011 = vmul.f32 %v657, %v374
        %v1012 = vmul.f32 %v662, %v375
        %v1013 = vmul.f32 %v662, %v376
        %v1014 = vmul.f32 %v667, %v377
        %v1015 = vmul.f32 %v667, %v378
        %v1016 = vmul.f32 %v672, %v379
        %v1017 = vmul.f32 %v672, %v380
        %v1018 = vmul.f32 %v677, %v381
        %v1019 = vmul.f32 %v677, %v382
        %v1020 = vmul.f32 %v682, %v383
        %v1021 = vmul.f32 %v682, %v384
        %v1022 = vmul.f32 %v687, %v385
        %v1023 = vmul.f32 %v687, %v386
        %v1024 = vmul.f32 %v692, %v387
        %v1025 = vmul.f32 %v692, %v388
        %v1026 = vmul.f32 %v697, %v389
        %v1027 = vmul.f32 %v697, %v390
        %v1028 = vmul.f32 %v702, %v391
        %v1029 = vmul.f32 %v702, %v392
        %v1030 = vmul.f32 %v707, %v393
        %v1031 = vmul.f32 %v707, %v394
        %v1032 = vmul.f32 %v712, %v395
        %v1033 = vmul.f32 %v712, %v396
        %v1034 = vmul.f32 %v717, %v397
        %v1035 = vmul.f32 %v717, %v398
        %v1036 = vmul.f32 %v722, %v399
        %v1037 = vmul.f32 %v722, %v400
        %v1038 = vmul.f32 %v727, %v401
        %v1039 = vmul.f32 %v727, %v402
        %v1040 = vmul.f32 %v732, %v403
        %v1041 = vmul.f32 %v732, %v404
        %v1042 = vmul.f32 %v737, %v405
        %v1043 = vmul.f32 %v737, %v406
        %v1044 = vmul.f32 %v742, %v407
        %v1045 = vmul.f32 %v742, %v408
        %v1046 = vmul.f32 %v747, %v409
        %v1047 = vmul.f32 %v747, %v410
        %v1048 = vmul.f32 %v752, %v411
        %v1049 = vmul.f32 %v752, %v412
        %v1050 = vmul.f32 %v757, %v413
        %v1051 = vmul.f32 %v757, %v414
        %v1052 = vmul.f32 %v762, %v415
        %v1053 = vmul.f32 %v762, %v416
        %v1054 = vmul.f32 %v767, %v417
        %v1055 = vmul.f32 %v767, %v418
        %v1056 = vmul.f32 %v772, %v419
        %v1057 = vmul.f32 %v772, %v420
        %v1058 = vmul.f32 %v777, %v421
        %v1059 = vmul.f32 %v777, %v422
        %v1060 = vmul.f32 %v782, %v423
        %v1061 = vmul.f32 %v782, %v424
        %v1062 = vmul.f32 %v787, %v425
        %v1063 = vmul.f32 %v787, %v426
        %v1064 = vmul.f32 %v792, %v427
        %v1065 = vmul.f32 %v792, %v428
        %v1066 = vmul.f32 %v797, %v429
        %v1067 = vmul.f32 %v797, %v430
        %v1068 = vmul.f32 %v802, %v431
        %v1069 = vmul.f32 %v802, %v432
        %v1070 = vmul.f32 %v807, %v433
        %v1071 = vmul.f32 %v807, %v434
        %v1072 = vmul.f32 %v812, %v435
        %v1073 = vmul.f32 %v812, %v436
        %v1074 = vmul.f32 %v817, %v437
        %v1075 = vmul.f32 %v817, %v438
        %v1076 = vmul.f32 %v822, %v439
        %v1077 = vmul.f32 %v822, %v440
        %v1078 = vmul.f32 %v827, %v441
        %v1079 = vmul.f32 %v827, %v442
        %v1080 = vmul.f32 %v832, %v443
        %v1081 = vmul.f32 %v832, %v444
        %v1082 = vmul.f32 %v837, %v445
        %v1083 = vmul.f32 %v837, %v446
        %v1084 = vmul.f32 %v842, %v447
        %v1085 = vmul.f32 %v842, %v448
        %v1086 = vmul.f32 %v847, %v449
        %v1087 = vmul.f32 %v847, %v450
        %v1088 = vmul.f32 %v852, %v451
        %v1089 = vmul.f32 %v852, %v452
        %v1090 = vmul.f32 %v857, %v453
        %v1091 = vmul.f32 %v857, %v454
        %v1092 = vmul.f32 %v862, %v455
        %v1093 = vmul.f32 %v862, %v456
        %v1094 = vmul.f32 %v867, %v457
        %v1095 = vmul.f32 %v867, %v458
        %v1096 = vmul.f32 %v872, %v459
        %v1097 = vmul.f32 %v872, %v460
        %v1098 = vmul.f32 %v877, %v461
        %v1099 = vmul.f32 %v877, %v462
        %v1100 = vmul.f32 %v882, %v463
        %v1101 = vmul.f32 %v882, %v464
        %v1102 = vmul.f32 %v887, %v465
        %v1103 = vmul.f32 %v887, %v466
        %v1104 = vmul.f32 %v892, %v467
        %v1105 = vmul.f32 %v892, %v468
        %v1106 = vmul.f32 %v897, %v469
        %v1107 = vmul.f32 %v897, %v470
        %v1108 = vmul.f32 %v902, %v471
        %v1109 = vmul.f32 %v902, %v472
        %v1110 = vmul.f32 %v907, %v473
        %v1111 = vmul.f32 %v907, %v474
        %v1112 = vmul.f32 %v912, %v475
        %v1113 = vmul.f32 %v912, %v476
        %v1114 = vmul.f32 %v917, %v477
        %v1115 = vmul.f32 %v917, %v478
        %v1116 = vmul.f32 %v922, %v479
        %v1117 = vmul.f32 %v922, %v480
        %v1118 = vmul.f32 %v927, %v481
        %v1119 = vmul.f32 %v927, %v482
        %v1120 = vmul.f32 %v932, %v483
        %v1121 = vmul.f32 %v932, %v484
        %v1122 = vmul.f32 %v937, %v485
        %v1123 = vmul.f32 %v937, %v486
        %v1124 = vmul.f32 %v942, %v487
        %v1125 = vmul.f32 %v942, %v488
        %1126 = vst [vmem:[%s178] sm:$0xff] %v944
        %vm1127 = vcmask 556032
        %1128 = vst.msk [vmem:[%s178 + $0x8] sm:$0xff] %vm1127, %v945
        %1129 = vst [vmem:[%s178 + $0x10] sm:$0xff] %v946
        %1130 = vst.msk [vmem:[%s178 + $0x18] sm:$0xff] %vm1127, %v947
        %1131 = vst [vmem:[%s178 + $0x20] sm:$0xff] %v948
        %1132 = vst.msk [vmem:[%s178 + $0x28] sm:$0xff] %vm1127, %v949
        %1133 = vst [vmem:[%s178 + $0x30] sm:$0xff] %v950
        %1134 = vst.msk [vmem:[%s178 + $0x38] sm:$0xff] %vm1127, %v951
        %1135 = vst [vmem:[%s178 + $0x40] sm:$0xff] %v952
        %1136 = vst.msk [vmem:[%s178 + $0x48] sm:$0xff] %vm1127, %v953
        %1137 = vst [vmem:[%s178 + $0x50] sm:$0xff] %v954
        %1138 = vst.msk [vmem:[%s178 + $0x58] sm:$0xff] %vm1127, %v955
        %1139 = vst [vmem:[%s178 + $0x60] sm:$0xff] %v956
        %1140 = vst.msk [vmem:[%s178 + $0x68] sm:$0xff] %vm1127, %v957
        %1141 = vst [vmem:[%s178 + $0x70] sm:$0xff] %v958
        %1142 = vst.msk [vmem:[%s178 + $0x78] sm:$0xff] %vm1127, %v959
        %1143 = vst [vmem:[%s178 + $0x80] sm:$0xff] %v960
        %1144 = vst.msk [vmem:[%s178 + $0x88] sm:$0xff] %vm1127, %v961
        %1145 = vst [vmem:[%s178 + $0x90] sm:$0xff] %v962
        %1146 = vst.msk [vmem:[%s178 + $0x98] sm:$0xff] %vm1127, %v963
        %1147 = vst [vmem:[%s178 + $0xa0] sm:$0xff] %v964
        %1148 = vst.msk [vmem:[%s178 + $0xa8] sm:$0xff] %vm1127, %v965
        %1149 = vst [vmem:[%s178 + $0xb0] sm:$0xff] %v966
        %1150 = vst.msk [vmem:[%s178 + $0xb8] sm:$0xff] %vm1127, %v967
        %1151 = vst [vmem:[%s178 + $0xc0] sm:$0xff] %v968
        %1152 = vst.msk [vmem:[%s178 + $0xc8] sm:$0xff] %vm1127, %v969
        %1153 = vst [vmem:[%s178 + $0xd0] sm:$0xff] %v970
        %1154 = vst.msk [vmem:[%s178 + $0xd8] sm:$0xff] %vm1127, %v971
        %1155 = vst [vmem:[%s178 + $0xe0] sm:$0xff] %v972
        %1156 = vst.msk [vmem:[%s178 + $0xe8] sm:$0xff] %vm1127, %v973
        %1157 = vst [vmem:[%s178 + $0xf0] sm:$0xff] %v974
        %1158 = vst.msk [vmem:[%s178 + $0xf8] sm:$0xff] %vm1127, %v975
        %1159 = vst [vmem:[%s178 + $0x100] sm:$0xff] %v976
        %1160 = vst.msk [vmem:[%s178 + $0x108] sm:$0xff] %vm1127, %v977
        %1161 = vst [vmem:[%s178 + $0x110] sm:$0xff] %v978
        %1162 = vst.msk [vmem:[%s178 + $0x118] sm:$0xff] %vm1127, %v979
        %1163 = vst [vmem:[%s178 + $0x120] sm:$0xff] %v980
        %1164 = vst.msk [vmem:[%s178 + $0x128] sm:$0xff] %vm1127, %v981
        %1165 = vst [vmem:[%s178 + $0x130] sm:$0xff] %v982
        %1166 = vst.msk [vmem:[%s178 + $0x138] sm:$0xff] %vm1127, %v983
        %1167 = vst [vmem:[%s178 + $0x140] sm:$0xff] %v984
        %1168 = vst.msk [vmem:[%s178 + $0x148] sm:$0xff] %vm1127, %v985
        %1169 = vst [vmem:[%s178 + $0x150] sm:$0xff] %v986
        %1170 = vst.msk [vmem:[%s178 + $0x158] sm:$0xff] %vm1127, %v987
        %1171 = vst [vmem:[%s178 + $0x160] sm:$0xff] %v988
        %1172 = vst.msk [vmem:[%s178 + $0x168] sm:$0xff] %vm1127, %v989
        %1173 = vst [vmem:[%s178 + $0x170] sm:$0xff] %v990
        %1174 = vst.msk [vmem:[%s178 + $0x178] sm:$0xff] %vm1127, %v991
        %1175 = vst [vmem:[%s178 + $0x180] sm:$0xff] %v992
        %1176 = vst.msk [vmem:[%s178 + $0x188] sm:$0xff] %vm1127, %v993
        %1177 = vst [vmem:[%s178 + $0x190] sm:$0xff] %v994
        %1178 = vst.msk [vmem:[%s178 + $0x198] sm:$0xff] %vm1127, %v995
        %1179 = vst [vmem:[%s178 + $0x1a0] sm:$0xff] %v996
        %1180 = vst.msk [vmem:[%s178 + $0x1a8] sm:$0xff] %vm1127, %v997
        %1181 = vst [vmem:[%s178 + $0x1b0] sm:$0xff] %v998
        %1182 = vst.msk [vmem:[%s178 + $0x1b8] sm:$0xff] %vm1127, %v999
        %1183 = vst [vmem:[%s178 + $0x1c0] sm:$0xff] %v1000
        %1184 = vst.msk [vmem:[%s178 + $0x1c8] sm:$0xff] %vm1127, %v1001
        %1185 = vst [vmem:[%s178 + $0x1d0] sm:$0xff] %v1002
        %1186 = vst.msk [vmem:[%s178 + $0x1d8] sm:$0xff] %vm1127, %v1003
        %1187 = vst [vmem:[%s178 + $0x1e0] sm:$0xff] %v1004
        %1188 = vst.msk [vmem:[%s178 + $0x1e8] sm:$0xff] %vm1127, %v1005
        %1189 = vst [vmem:[%s178 + $0x1f0] sm:$0xff] %v1006
        %1190 = vst.msk [vmem:[%s178 + $0x1f8] sm:$0xff] %vm1127, %v1007
        %1191 = vst [vmem:[%s178 + $0x200] sm:$0xff] %v1008
        %1192 = vst.msk [vmem:[%s178 + $0x208] sm:$0xff] %vm1127, %v1009
        %1193 = vst [vmem:[%s178 + $0x210] sm:$0xff] %v1010
        %1194 = vst.msk [vmem:[%s178 + $0x218] sm:$0xff] %vm1127, %v1011
        %1195 = vst [vmem:[%s178 + $0x220] sm:$0xff] %v1012
        %1196 = vst.msk [vmem:[%s178 + $0x228] sm:$0xff] %vm1127, %v1013
        %1197 = vst [vmem:[%s178 + $0x230] sm:$0xff] %v1014
        %1198 = vst.msk [vmem:[%s178 + $0x238] sm:$0xff] %vm1127, %v1015
        %1199 = vst [vmem:[%s178 + $0x240] sm:$0xff] %v1016
        %1200 = vst.msk [vmem:[%s178 + $0x248] sm:$0xff] %vm1127, %v1017
        %1201 = vst [vmem:[%s178 + $0x250] sm:$0xff] %v1018
        %1202 = vst.msk [vmem:[%s178 + $0x258] sm:$0xff] %vm1127, %v1019
        %1203 = vst [vmem:[%s178 + $0x260] sm:$0xff] %v1020
        %1204 = vst.msk [vmem:[%s178 + $0x268] sm:$0xff] %vm1127, %v1021
        %1205 = vst [vmem:[%s178 + $0x270] sm:$0xff] %v1022
        %1206 = vst.msk [vmem:[%s178 + $0x278] sm:$0xff] %vm1127, %v1023
        %1207 = vst [vmem:[%s178 + $0x280] sm:$0xff] %v1024
        %1208 = vst.msk [vmem:[%s178 + $0x288] sm:$0xff] %vm1127, %v1025
        %1209 = vst [vmem:[%s178 + $0x290] sm:$0xff] %v1026
        %1210 = vst.msk [vmem:[%s178 + $0x298] sm:$0xff] %vm1127, %v1027
        %1211 = vst [vmem:[%s178 + $0x2a0] sm:$0xff] %v1028
        %1212 = vst.msk [vmem:[%s178 + $0x2a8] sm:$0xff] %vm1127, %v1029
        %1213 = vst [vmem:[%s178 + $0x2b0] sm:$0xff] %v1030
        %1214 = vst.msk [vmem:[%s178 + $0x2b8] sm:$0xff] %vm1127, %v1031
        %1215 = vst [vmem:[%s178 + $0x2c0] sm:$0xff] %v1032
        %1216 = vst.msk [vmem:[%s178 + $0x2c8] sm:$0xff] %vm1127, %v1033
        %1217 = vst [vmem:[%s178 + $0x2d0] sm:$0xff] %v1034
        %1218 = vst.msk [vmem:[%s178 + $0x2d8] sm:$0xff] %vm1127, %v1035
        %1219 = vst [vmem:[%s178 + $0x2e0] sm:$0xff] %v1036
        %1220 = vst.msk [vmem:[%s178 + $0x2e8] sm:$0xff] %vm1127, %v1037
        %1221 = vst [vmem:[%s178 + $0x2f0] sm:$0xff] %v1038
        %1222 = vst.msk [vmem:[%s178 + $0x2f8] sm:$0xff] %vm1127, %v1039
        %1223 = vst [vmem:[%s178 + $0x300] sm:$0xff] %v1040
        %1224 = vst.msk [vmem:[%s178 + $0x308] sm:$0xff] %vm1127, %v1041
        %1225 = vst [vmem:[%s178 + $0x310] sm:$0xff] %v1042
        %1226 = vst.msk [vmem:[%s178 + $0x318] sm:$0xff] %vm1127, %v1043
        %1227 = vst [vmem:[%s178 + $0x320] sm:$0xff] %v1044
        %1228 = vst.msk [vmem:[%s178 + $0x328] sm:$0xff] %vm1127, %v1045
        %1229 = vst [vmem:[%s178 + $0x330] sm:$0xff] %v1046
        %1230 = vst.msk [vmem:[%s178 + $0x338] sm:$0xff] %vm1127, %v1047
        %1231 = vst [vmem:[%s178 + $0x340] sm:$0xff] %v1048
        %1232 = vst.msk [vmem:[%s178 + $0x348] sm:$0xff] %vm1127, %v1049
        %1233 = vst [vmem:[%s178 + $0x350] sm:$0xff] %v1050
        %1234 = vst.msk [vmem:[%s178 + $0x358] sm:$0xff] %vm1127, %v1051
        %1235 = vst [vmem:[%s178 + $0x360] sm:$0xff] %v1052
        %1236 = vst.msk [vmem:[%s178 + $0x368] sm:$0xff] %vm1127, %v1053
        %1237 = vst [vmem:[%s178 + $0x370] sm:$0xff] %v1054
        %1238 = vst.msk [vmem:[%s178 + $0x378] sm:$0xff] %vm1127, %v1055
        %1239 = vst [vmem:[%s178 + $0x380] sm:$0xff] %v1056
        %1240 = vst.msk [vmem:[%s178 + $0x388] sm:$0xff] %vm1127, %v1057
        %1241 = vst [vmem:[%s178 + $0x390] sm:$0xff] %v1058
        %1242 = vst.msk [vmem:[%s178 + $0x398] sm:$0xff] %vm1127, %v1059
        %1243 = vst [vmem:[%s178 + $0x3a0] sm:$0xff] %v1060
        %1244 = vst.msk [vmem:[%s178 + $0x3a8] sm:$0xff] %vm1127, %v1061
        %1245 = vst [vmem:[%s178 + $0x3b0] sm:$0xff] %v1062
        %1246 = vst.msk [vmem:[%s178 + $0x3b8] sm:$0xff] %vm1127, %v1063
        %1247 = vst [vmem:[%s178 + $0x3c0] sm:$0xff] %v1064
        %1248 = vst.msk [vmem:[%s178 + $0x3c8] sm:$0xff] %vm1127, %v1065
        %1249 = vst [vmem:[%s178 + $0x3d0] sm:$0xff] %v1066
        %1250 = vst.msk [vmem:[%s178 + $0x3d8] sm:$0xff] %vm1127, %v1067
        %1251 = vst [vmem:[%s178 + $0x3e0] sm:$0xff] %v1068
        %1252 = vst.msk [vmem:[%s178 + $0x3e8] sm:$0xff] %vm1127, %v1069
        %1253 = vst [vmem:[%s178 + $0x3f0] sm:$0xff] %v1070
        %1254 = vst.msk [vmem:[%s178 + $0x3f8] sm:$0xff] %vm1127, %v1071
        %1255 = vst [vmem:[%s178 + $0x400] sm:$0xff] %v1072
        %1256 = vst.msk [vmem:[%s178 + $0x408] sm:$0xff] %vm1127, %v1073
        %1257 = vst [vmem:[%s178 + $0x410] sm:$0xff] %v1074
        %1258 = vst.msk [vmem:[%s178 + $0x418] sm:$0xff] %vm1127, %v1075
        %1259 = vst [vmem:[%s178 + $0x420] sm:$0xff] %v1076
        %1260 = vst.msk [vmem:[%s178 + $0x428] sm:$0xff] %vm1127, %v1077
        %1261 = vst [vmem:[%s178 + $0x430] sm:$0xff] %v1078
        %1262 = vst.msk [vmem:[%s178 + $0x438] sm:$0xff] %vm1127, %v1079
        %1263 = vst [vmem:[%s178 + $0x440] sm:$0xff] %v1080
        %1264 = vst.msk [vmem:[%s178 + $0x448] sm:$0xff] %vm1127, %v1081
        %1265 = vst [vmem:[%s178 + $0x450] sm:$0xff] %v1082
        %1266 = vst.msk [vmem:[%s178 + $0x458] sm:$0xff] %vm1127, %v1083
        %1267 = vst [vmem:[%s178 + $0x460] sm:$0xff] %v1084
        %1268 = vst.msk [vmem:[%s178 + $0x468] sm:$0xff] %vm1127, %v1085
        %1269 = vst [vmem:[%s178 + $0x470] sm:$0xff] %v1086
        %1270 = vst.msk [vmem:[%s178 + $0x478] sm:$0xff] %vm1127, %v1087
        %1271 = vst [vmem:[%s178 + $0x480] sm:$0xff] %v1088
        %1272 = vst.msk [vmem:[%s178 + $0x488] sm:$0xff] %vm1127, %v1089
        %1273 = vst [vmem:[%s178 + $0x490] sm:$0xff] %v1090
        %1274 = vst.msk [vmem:[%s178 + $0x498] sm:$0xff] %vm1127, %v1091
        %1275 = vst [vmem:[%s178 + $0x4a0] sm:$0xff] %v1092
        %1276 = vst.msk [vmem:[%s178 + $0x4a8] sm:$0xff] %vm1127, %v1093
        %1277 = vst [vmem:[%s178 + $0x4b0] sm:$0xff] %v1094
        %1278 = vst.msk [vmem:[%s178 + $0x4b8] sm:$0xff] %vm1127, %v1095
        %1279 = vst [vmem:[%s178 + $0x4c0] sm:$0xff] %v1096
        %1280 = vst.msk [vmem:[%s178 + $0x4c8] sm:$0xff] %vm1127, %v1097
        %1281 = vst [vmem:[%s178 + $0x4d0] sm:$0xff] %v1098
        %1282 = vst.msk [vmem:[%s178 + $0x4d8] sm:$0xff] %vm1127, %v1099
        %1283 = vst [vmem:[%s178 + $0x4e0] sm:$0xff] %v1100
        %1284 = vst.msk [vmem:[%s178 + $0x4e8] sm:$0xff] %vm1127, %v1101
        %1285 = vst [vmem:[%s178 + $0x4f0] sm:$0xff] %v1102
        %1286 = vst.msk [vmem:[%s178 + $0x4f8] sm:$0xff] %vm1127, %v1103
        %1287 = vst [vmem:[%s178 + $0x500] sm:$0xff] %v1104
        %1288 = vst.msk [vmem:[%s178 + $0x508] sm:$0xff] %vm1127, %v1105
        %1289 = vst [vmem:[%s178 + $0x510] sm:$0xff] %v1106
        %1290 = vst.msk [vmem:[%s178 + $0x518] sm:$0xff] %vm1127, %v1107
        %1291 = vst [vmem:[%s178 + $0x520] sm:$0xff] %v1108
        %1292 = vst.msk [vmem:[%s178 + $0x528] sm:$0xff] %vm1127, %v1109
        %1293 = vst [vmem:[%s178 + $0x530] sm:$0xff] %v1110
        %1294 = vst.msk [vmem:[%s178 + $0x538] sm:$0xff] %vm1127, %v1111
        %1295 = vst [vmem:[%s178 + $0x540] sm:$0xff] %v1112
        %1296 = vst.msk [vmem:[%s178 + $0x548] sm:$0xff] %vm1127, %v1113
        %1297 = vst [vmem:[%s178 + $0x550] sm:$0xff] %v1114
        %1298 = vst.msk [vmem:[%s178 + $0x558] sm:$0xff] %vm1127, %v1115
        %1299 = vst [vmem:[%s178 + $0x560] sm:$0xff] %v1116
        %1300 = vst.msk [vmem:[%s178 + $0x568] sm:$0xff] %vm1127, %v1117
        %1301 = vst [vmem:[%s178 + $0x570] sm:$0xff] %v1118
        %1302 = vst.msk [vmem:[%s178 + $0x578] sm:$0xff] %vm1127, %v1119
        %1303 = vst [vmem:[%s178 + $0x580] sm:$0xff] %v1120
        %1304 = vst.msk [vmem:[%s178 + $0x588] sm:$0xff] %vm1127, %v1121
        %1305 = vst [vmem:[%s178 + $0x590] sm:$0xff] %v1122
        %1306 = vst.msk [vmem:[%s178 + $0x598] sm:$0xff] %vm1127, %v1123
        %1307 = vst [vmem:[%s178 + $0x5a0] sm:$0xff] %v1124
        %1308 = vst.msk [vmem:[%s178 + $0x5a8] sm:$0xff] %vm1127, %v1125
        %s1309 = sand.u32 %s73, 1
        %s1310 = sand.u32 %s73, 1
        %s1311 = smul.addr %s1310, 1456
        %s1312 = scalar_lea.vmem [#allocation2], %s1311
        // Predicated region
        $region29: #{tpu_custom_call.1} parent=27 // pred_check
          %p1313 = pneg %p83
        $region30: #{tpu_custom_call.1} parent=27 // pred_check_branch
          %1315 = sbr.rel (%p1313) target = $region32
        $region31: #{tpu_custom_call.1} parent=27 // pred_region
          %s1316 = smul.u32 91, %s13
          %s1317 = ssub.s32 363, %s1316
          %p1318 = scmp.lt.s32.totalorder %s1317, 91
          %s1319 = scalar_select %p1318, %s1317, 91
          %s1320 = smul.u32 128, %s1319
          %s1321 = smul.u32 %s1320, 2
          %p1322 = scmp.ne.s32.totalorder 0, %s1321
          %s1323 = smul.addr %s1316, 2
          %s1324 = smul.addr %s1323, 8
          %s1325 = scalar_lea.vmem %s2, %s1324
          // Predicated region
          $region33: #{tpu_custom_call.1} parent=31 // pred_check
            %p1326 = pneg %p1322
          $region34: #{tpu_custom_call.1} parent=31 // pred_check_branch
            %1328 = sbr.rel (%p1326) target = $region36
          $region35: #{tpu_custom_call.1} parent=31 // pred_region
            // Predicated region
            $region37: #{tpu_custom_call.1} parent=35 // pred_check
              _
            $region38: #{tpu_custom_call.1} parent=35 // pred_check_branch
              %1330 = sbr.rel (0) target = $region40
            $region39: #{tpu_custom_call.1} parent=35 // pred_region
              %s1331 = sshrl.u32 %s1319, 5
              // While loop
              $region41: #{tpu_custom_call.1} parent=39 // loop_pre_header
                _
              $region42: #{tpu_custom_call.1} parent=39 // loop_header
                %s1333 = sphi 0, %s1335
                %p1334 = scmp.ge.s32.totalorder %s1333, %s1331
                %s1338 = sphi 0, %s1471
                %s1339 = sphi %s1312, %s1474
                %s1340 = sphi %s1325, %s1475
              $region43: #{tpu_custom_call.1} parent=39 // loop_header_branch
                %1337 = sbr.rel (%p1334) target = $region47
              $region44: #{tpu_custom_call.1} parent=39 // loop_body
                %v1341 = vld [vmem:[%s1339] sm:$0xff]
                %1342 = vst [vmem:[%s1340] sm:$0xff] %v1341
                %v1343 = vld [vmem:[%s1339 + $0x10] sm:$0xff]
                %1344 = vst [vmem:[%s1340 + $0x10] sm:$0xff] %v1343
                %v1345 = vld [vmem:[%s1339 + $0x20] sm:$0xff]
                %1346 = vst [vmem:[%s1340 + $0x20] sm:$0xff] %v1345
                %v1347 = vld [vmem:[%s1339 + $0x30] sm:$0xff]
                %1348 = vst [vmem:[%s1340 + $0x30] sm:$0xff] %v1347
                %v1349 = vld [vmem:[%s1339 + $0x40] sm:$0xff]
                %1350 = vst [vmem:[%s1340 + $0x40] sm:$0xff] %v1349
                %v1351 = vld [vmem:[%s1339 + $0x50] sm:$0xff]
                %1352 = vst [vmem:[%s1340 + $0x50] sm:$0xff] %v1351
                %v1353 = vld [vmem:[%s1339 + $0x60] sm:$0xff]
                %1354 = vst [vmem:[%s1340 + $0x60] sm:$0xff] %v1353
                %v1355 = vld [vmem:[%s1339 + $0x70] sm:$0xff]
                %1356 = vst [vmem:[%s1340 + $0x70] sm:$0xff] %v1355
                %v1357 = vld [vmem:[%s1339 + $0x80] sm:$0xff]
                %1358 = vst [vmem:[%s1340 + $0x80] sm:$0xff] %v1357
                %v1359 = vld [vmem:[%s1339 + $0x90] sm:$0xff]
                %1360 = vst [vmem:[%s1340 + $0x90] sm:$0xff] %v1359
                %v1361 = vld [vmem:[%s1339 + $0xa0] sm:$0xff]
                %1362 = vst [vmem:[%s1340 + $0xa0] sm:$0xff] %v1361
                %v1363 = vld [vmem:[%s1339 + $0xb0] sm:$0xff]
                %1364 = vst [vmem:[%s1340 + $0xb0] sm:$0xff] %v1363
                %v1365 = vld [vmem:[%s1339 + $0xc0] sm:$0xff]
                %1366 = vst [vmem:[%s1340 + $0xc0] sm:$0xff] %v1365
                %v1367 = vld [vmem:[%s1339 + $0xd0] sm:$0xff]
                %1368 = vst [vmem:[%s1340 + $0xd0] sm:$0xff] %v1367
                %v1369 = vld [vmem:[%s1339 + $0xe0] sm:$0xff]
                %1370 = vst [vmem:[%s1340 + $0xe0] sm:$0xff] %v1369
                %v1371 = vld [vmem:[%s1339 + $0xf0] sm:$0xff]
                %1372 = vst [vmem:[%s1340 + $0xf0] sm:$0xff] %v1371
                %v1373 = vld [vmem:[%s1339 + $0x100] sm:$0xff]
                %1374 = vst [vmem:[%s1340 + $0x100] sm:$0xff] %v1373
                %v1375 = vld [vmem:[%s1339 + $0x110] sm:$0xff]
                %1376 = vst [vmem:[%s1340 + $0x110] sm:$0xff] %v1375
                %v1377 = vld [vmem:[%s1339 + $0x120] sm:$0xff]
                %1378 = vst [vmem:[%s1340 + $0x120] sm:$0xff] %v1377
                %v1379 = vld [vmem:[%s1339 + $0x130] sm:$0xff]
                %1380 = vst [vmem:[%s1340 + $0x130] sm:$0xff] %v1379
                %v1381 = vld [vmem:[%s1339 + $0x140] sm:$0xff]
                %1382 = vst [vmem:[%s1340 + $0x140] sm:$0xff] %v1381
                %v1383 = vld [vmem:[%s1339 + $0x150] sm:$0xff]
                %1384 = vst [vmem:[%s1340 + $0x150] sm:$0xff] %v1383
                %v1385 = vld [vmem:[%s1339 + $0x160] sm:$0xff]
                %1386 = vst [vmem:[%s1340 + $0x160] sm:$0xff] %v1385
                %v1387 = vld [vmem:[%s1339 + $0x170] sm:$0xff]
                %1388 = vst [vmem:[%s1340 + $0x170] sm:$0xff] %v1387
                %v1389 = vld [vmem:[%s1339 + $0x180] sm:$0xff]
                %1390 = vst [vmem:[%s1340 + $0x180] sm:$0xff] %v1389
                %v1391 = vld [vmem:[%s1339 + $0x190] sm:$0xff]
                %1392 = vst [vmem:[%s1340 + $0x190] sm:$0xff] %v1391
                %v1393 = vld [vmem:[%s1339 + $0x1a0] sm:$0xff]
                %1394 = vst [vmem:[%s1340 + $0x1a0] sm:$0xff] %v1393
                %v1395 = vld [vmem:[%s1339 + $0x1b0] sm:$0xff]
                %1396 = vst [vmem:[%s1340 + $0x1b0] sm:$0xff] %v1395
                %v1397 = vld [vmem:[%s1339 + $0x1c0] sm:$0xff]
                %1398 = vst [vmem:[%s1340 + $0x1c0] sm:$0xff] %v1397
                %v1399 = vld [vmem:[%s1339 + $0x1d0] sm:$0xff]
                %1400 = vst [vmem:[%s1340 + $0x1d0] sm:$0xff] %v1399
                %v1401 = vld [vmem:[%s1339 + $0x1e0] sm:$0xff]
                %1402 = vst [vmem:[%s1340 + $0x1e0] sm:$0xff] %v1401
                %v1403 = vld [vmem:[%s1339 + $0x1f0] sm:$0xff]
                %1404 = vst [vmem:[%s1340 + $0x1f0] sm:$0xff] %v1403
                %v1405 = vld [vmem:[%s1339 + $0x8] sm:$0xff]
                %1406 = vst [vmem:[%s1340 + $0x8] sm:$0xff] %v1405
                %v1407 = vld [vmem:[%s1339 + $0x18] sm:$0xff]
                %1408 = vst [vmem:[%s1340 + $0x18] sm:$0xff] %v1407
                %v1409 = vld [vmem:[%s1339 + $0x28] sm:$0xff]
                %1410 = vst [vmem:[%s1340 + $0x28] sm:$0xff] %v1409
                %v1411 = vld [vmem:[%s1339 + $0x38] sm:$0xff]
                %1412 = vst [vmem:[%s1340 + $0x38] sm:$0xff] %v1411
                %v1413 = vld [vmem:[%s1339 + $0x48] sm:$0xff]
                %1414 = vst [vmem:[%s1340 + $0x48] sm:$0xff] %v1413
                %v1415 = vld [vmem:[%s1339 + $0x58] sm:$0xff]
                %1416 = vst [vmem:[%s1340 + $0x58] sm:$0xff] %v1415
                %v1417 = vld [vmem:[%s1339 + $0x68] sm:$0xff]
                %1418 = vst [vmem:[%s1340 + $0x68] sm:$0xff] %v1417
                %v1419 = vld [vmem:[%s1339 + $0x78] sm:$0xff]
                %1420 = vst [vmem:[%s1340 + $0x78] sm:$0xff] %v1419
                %v1421 = vld [vmem:[%s1339 + $0x88] sm:$0xff]
                %1422 = vst [vmem:[%s1340 + $0x88] sm:$0xff] %v1421
                %v1423 = vld [vmem:[%s1339 + $0x98] sm:$0xff]
                %1424 = vst [vmem:[%s1340 + $0x98] sm:$0xff] %v1423
                %v1425 = vld [vmem:[%s1339 + $0xa8] sm:$0xff]
                %1426 = vst [vmem:[%s1340 + $0xa8] sm:$0xff] %v1425
                %v1427 = vld [vmem:[%s1339 + $0xb8] sm:$0xff]
                %1428 = vst [vmem:[%s1340 + $0xb8] sm:$0xff] %v1427
                %v1429 = vld [vmem:[%s1339 + $0xc8] sm:$0xff]
                %1430 = vst [vmem:[%s1340 + $0xc8] sm:$0xff] %v1429
                %v1431 = vld [vmem:[%s1339 + $0xd8] sm:$0xff]
                %1432 = vst [vmem:[%s1340 + $0xd8] sm:$0xff] %v1431
                %v1433 = vld [vmem:[%s1339 + $0xe8] sm:$0xff]
                %1434 = vst [vmem:[%s1340 + $0xe8] sm:$0xff] %v1433
                %v1435 = vld [vmem:[%s1339 + $0xf8] sm:$0xff]
                %1436 = vst [vmem:[%s1340 + $0xf8] sm:$0xff] %v1435
                %v1437 = vld [vmem:[%s1339 + $0x108] sm:$0xff]
                %1438 = vst [vmem:[%s1340 + $0x108] sm:$0xff] %v1437
                %v1439 = vld [vmem:[%s1339 + $0x118] sm:$0xff]
                %1440 = vst [vmem:[%s1340 + $0x118] sm:$0xff] %v1439
                %v1441 = vld [vmem:[%s1339 + $0x128] sm:$0xff]
                %1442 = vst [vmem:[%s1340 + $0x128] sm:$0xff] %v1441
                %v1443 = vld [vmem:[%s1339 + $0x138] sm:$0xff]
                %1444 = vst [vmem:[%s1340 + $0x138] sm:$0xff] %v1443
                %v1445 = vld [vmem:[%s1339 + $0x148] sm:$0xff]
                %1446 = vst [vmem:[%s1340 + $0x148] sm:$0xff] %v1445
                %v1447 = vld [vmem:[%s1339 + $0x158] sm:$0xff]
                %1448 = vst [vmem:[%s1340 + $0x158] sm:$0xff] %v1447
                %v1449 = vld [vmem:[%s1339 + $0x168] sm:$0xff]
                %1450 = vst [vmem:[%s1340 + $0x168] sm:$0xff] %v1449
                %v1451 = vld [vmem:[%s1339 + $0x178] sm:$0xff]
                %1452 = vst [vmem:[%s1340 + $0x178] sm:$0xff] %v1451
                %v1453 = vld [vmem:[%s1339 + $0x188] sm:$0xff]
                %1454 = vst [vmem:[%s1340 + $0x188] sm:$0xff] %v1453
                %v1455 = vld [vmem:[%s1339 + $0x198] sm:$0xff]
                %1456 = vst [vmem:[%s1340 + $0x198] sm:$0xff] %v1455
                %v1457 = vld [vmem:[%s1339 + $0x1a8] sm:$0xff]
                %1458 = vst [vmem:[%s1340 + $0x1a8] sm:$0xff] %v1457
                %v1459 = vld [vmem:[%s1339 + $0x1b8] sm:$0xff]
                %1460 = vst [vmem:[%s1340 + $0x1b8] sm:$0xff] %v1459
                %v1461 = vld [vmem:[%s1339 + $0x1c8] sm:$0xff]
                %1462 = vst [vmem:[%s1340 + $0x1c8] sm:$0xff] %v1461
                %v1463 = vld [vmem:[%s1339 + $0x1d8] sm:$0xff]
                %1464 = vst [vmem:[%s1340 + $0x1d8] sm:$0xff] %v1463
                %v1465 = vld [vmem:[%s1339 + $0x1e8] sm:$0xff]
                %1466 = vst [vmem:[%s1340 + $0x1e8] sm:$0xff] %v1465
                %v1467 = vld [vmem:[%s1339 + $0x1f8] sm:$0xff]
                %1468 = vst [vmem:[%s1340 + $0x1f8] sm:$0xff] %v1467
                %s1469 = sadd.s32 1, %s1338
                %p1470 = scmp.ge.s32.totalorder %s1469, %s1331
                %s1471 = scalar_select %p1470, 0, %s1469
                %s1472 = smul.u32 %s1471, 512
                %s1473 = smul.u32 %s1471, 512
                %s1474 = scalar_lea.vmem %s1312, %s1472 [#allocation2]
                %s1475 = scalar_lea.vmem %s1325, %s1473
              $region45: #{tpu_custom_call.1} parent=39 // loop_footer
                %s1335 = sadd.s32 %s1333, 1
              $region46: #{tpu_custom_call.1} parent=39 // loop_footer_branch
                %1332 = sbr.rel target = $region42
              $region47: #{tpu_custom_call.1} parent=39 // loop_exit
                _
              %s1476 = sshrl.u32 %s1319, 5
              %s1477 = sand.u32 %s1319, 31
              %s1478 = smul.u32 %s1476, 32
              %s1479 = smul.u32 16, %s1478
              %s1480 = scalar_lea.vmem %s1312, %s1479 [#allocation2]
              %s1481 = smul.u32 16, %s1478
              %s1482 = scalar_lea.vmem %s1325, %s1481
              // While loop
              $region48: #{tpu_custom_call.1} parent=39 // loop_pre_header
                _
              $region49: #{tpu_custom_call.1} parent=39 // loop_header
                %s1484 = sphi 0, %s1486
                %p1485 = scmp.ge.s32.totalorder %s1484, %s1477
                %s1489 = sphi 0, %s1498
                %s1490 = sphi %s1480, %s1501
                %s1491 = sphi %s1482, %s1502
              $region50: #{tpu_custom_call.1} parent=39 // loop_header_branch
                %1488 = sbr.rel (%p1485) target = $region54
              $region51: #{tpu_custom_call.1} parent=39 // loop_body
                %v1492 = vld [vmem:[%s1490] sm:$0xff]
                %1493 = vst [vmem:[%s1491] sm:$0xff] %v1492
                %v1494 = vld [vmem:[%s1490 + $0x8] sm:$0xff]
                %1495 = vst [vmem:[%s1491 + $0x8] sm:$0xff] %v1494
                %s1496 = sadd.s32 1, %s1489
                %p1497 = scmp.ge.s32.totalorder %s1496, %s1477
                %s1498 = scalar_select %p1497, 0, %s1496
                %s1499 = smul.u32 %s1498, 16
                %s1500 = smul.u32 %s1498, 16
                %s1501 = scalar_lea.vmem %s1480, %s1499 [#allocation2]
                %s1502 = scalar_lea.vmem %s1482, %s1500
              $region52: #{tpu_custom_call.1} parent=39 // loop_footer
                %s1486 = sadd.s32 %s1484, 1
              $region53: #{tpu_custom_call.1} parent=39 // loop_footer_branch
                %1483 = sbr.rel target = $region49
              $region54: #{tpu_custom_call.1} parent=39 // loop_exit
                _
            $region40: #{tpu_custom_call.1} parent=35 // pred_fallthru
              _
            // Predicated region
            $region55: #{tpu_custom_call.1} parent=35 // pred_check
              _
            $region56: #{tpu_custom_call.1} parent=35 // pred_check_branch
              %1504 = sbr.rel target = $region58
            $region57: #{tpu_custom_call.1} parent=35 // pred_region
              _
            $region58: #{tpu_custom_call.1} parent=35 // pred_fallthru
              _
          $region36: #{tpu_custom_call.1} parent=31 // pred_fallthru
            _
          %1505 = vnop
        $region32: #{tpu_custom_call.1} parent=27 // pred_fallthru
          _
      $region28: #{tpu_custom_call.1} parent=5 // pred_fallthru
        _
      %p1506 = scmp.le.s32.totalorder 2, %s8
      // Predicated region
      $region59: #{tpu_custom_call.1} parent=5 // pred_check
        %p1507 = pneg %p1506
      $region60: #{tpu_custom_call.1} parent=5 // pred_check_branch
        %1509 = sbr.rel (%p1507) target = $region62
      $region61: #{tpu_custom_call.1} parent=5 // pred_region
        %s1510 = ssub.s32 %s8, 2
        // Predicated region
        $region63: #{tpu_custom_call.1} parent=61 // pred_check
          %p1511 = pneg %p89
        $region64: #{tpu_custom_call.1} parent=61 // pred_check_branch
          %1513 = sbr.rel (%p1511) target = $region66
        $region65: #{tpu_custom_call.1} parent=61 // pred_region
          %s1514 = sand.u32 %s74, 1
          %s1515 = sand.u32 %s74, 1
          %s1516 = smul.addr %s1515, 1456
          %s1517 = scalar_lea.vmem [#allocation2], %s1516
        $region66: #{tpu_custom_call.1} parent=61 // pred_fallthru
          _
      $region62: #{tpu_custom_call.1} parent=5 // pred_fallthru
        _
    $region6: #{tpu_custom_call.1} parent=1 // loop_footer
      %s12 = sadd.s32 1, %s8
    $region7: #{tpu_custom_call.1} parent=1 // loop_footer_branch
      %7 = sbr.rel target = $region3
    $region8: #{tpu_custom_call.1} parent=1 // loop_exit
      _

</llo_original>
